<compile_context>
chip_gen: v7x
topology: tpu7x:2x2x1
jax: 0.10.0
libtpu: 0.0.40
codegen_flags: <defaults>
</compile_context>

<pallas_src>
import functools

import jax
import jax.numpy as jnp
from jax.experimental import pallas as pl
from jax.experimental.pallas import tpu as pltpu


# ----------------------------- Pallas kernel --------------------------------

def fused_lstm_fc_kernel(num_layers, seq_len, batch, x_ref, *args):
    """Entire LSTMModel forward in one kernel invocation.

    x_ref : (B*S, I) f32, batch-major rows (row b*S + t == x[b, t, :])
    args  : [w_ih_l (I_l,4H) bf16, w_hh_l (H,4H) bf16, b_l (1,4H) f32] * L,
            w_fc (H,O) bf16, b_fc (1,O) f32,
            out_ref (B,O) f32
    """
    layer_refs = args[:3 * num_layers]
    wfc_ref, bfc_ref, out_ref = args[3 * num_layers:]
    H = layer_refs[1].shape[0]  # w_hh_0 is (H, 4H)

    # Load all weights once (everything is VMEM-resident, ~tens of KB here).
    w_ih = [layer_refs[3 * l][...] for l in range(num_layers)]      # bf16
    w_hh = [layer_refs[3 * l + 1][...] for l in range(num_layers)]  # bf16
    bias = [layer_refs[3 * l + 2][...] for l in range(num_layers)]  # f32

    # Fused gate nonlinearity: one tanh EUP push over the full (B,4H) register.
    # sigmoid(x) == 0.5*tanh(0.5*x)+0.5 (exact); g-gate lanes [2H,3H) keep
    # scale 1.0 and no affine blend.  Hoisted out of the unrolled loops
    # (JAX doesn't CSE broadcast_in_dim).
    lane = jax.lax.broadcasted_iota(jnp.int32, (batch, 4 * H), 1)
    is_g = jnp.logical_and(lane >= 2 * H, lane < 3 * H)
    pre_scale = jnp.where(is_g, 1.0, 0.5).astype(jnp.float32)

    def activate(gates_f32):
        t = jnp.tanh(gates_f32 * pre_scale)
        return jnp.where(is_g, t, 0.5 * t + 0.5)

    # Layer-0 input projection for ALL time steps in ONE MXU matmul
    # (bf16 operands, f32 accumulate), bias folded in.
    x_bf = x_ref[...].astype(jnp.bfloat16)                              # (B*S, I)
    gx0 = jnp.dot(x_bf, w_ih[0], preferred_element_type=jnp.float32) + bias[0]
    # Per-step (B,4H) blocks (static row gathers b*S+t); these depend only on
    # x so they sit off the recurrent critical path.
    gx0_steps = [
        jnp.concatenate(
            [gx0[b * seq_len + t: b * seq_len + t + 1, :] for b in range(batch)],
            axis=0)
        for t in range(seq_len)
    ]

    # Wavefront-fused recurrence: diagonal d runs layer l at time step d-l.
    h = [jnp.zeros((batch, H), jnp.float32) for _ in range(num_layers)]
    c = [jnp.zeros((batch, H), jnp.float32) for _ in range(num_layers)]

    # NOTE: fully unrolled (S, num_layers are tiny & static).  If S or
    # num_layers grow beyond toy sizes, switch to lax.fori_loop(..., unroll=k)
    # over diagonals with weights hoisted outside, to bound live ranges.
    for d in range(seq_len + num_layers - 1):
        # Top-down layer order so layer l still reads layer l-1's state from
        # the PREVIOUS diagonal (== its value at time step d-l), as required.
        for l in range(num_layers - 1, -1, -1):
            t = d - l
            if t < 0 or t >= seq_len:
                continue
            if l == 0:
                gates = gx0_steps[t] + jnp.dot(
                    h[0].astype(jnp.bfloat16), w_hh[0],
                    preferred_element_type=jnp.float32)
            else:
                # Input contribution comes straight from layer l-1's fresh h
                # (previous diagonal); both small dots are independent MXU
                # pushes within the diagonal.
                gates = (
                    jnp.dot(h[l - 1].astype(jnp.bfloat16), w_ih[l],
                            preferred_element_type=jnp.float32)
                    + jnp.dot(h[l].astype(jnp.bfloat16), w_hh[l],
                              preferred_element_type=jnp.float32)
                    + bias[l])
            act = activate(gates)                    # one EUP push for i,f,g,o
            i_g = act[:, 0 * H:1 * H]
            f_g = act[:, 1 * H:2 * H]
            g_g = act[:, 2 * H:3 * H]
            o_g = act[:, 3 * H:4 * H]
            c[l] = f_g * c[l] + i_g * g_g
            h[l] = o_g * jnp.tanh(c[l])
        # TODO(synk): nn.LSTM inter-layer dropout is train-mode only; this
        #             matches eval()/inference semantics (dropout = identity).

    # Fused FC on the final top-layer hidden state (== out[:, -1, :]).
    out_ref[...] = (
        jnp.dot(h[num_layers - 1].astype(jnp.bfloat16), wfc_ref[...],
                preferred_element_type=jnp.float32) + bfc_ref[...]
    ).astype(out_ref.dtype)


# ------------------------------ JAX wrapper ----------------------------------

@jax.jit
def lstm_model_forward(x_bsf, params):
    """Equivalent of LSTMModel.forward.

    x_bsf : (B, S, input_size)  (batch_first, like the PyTorch module)
    returns (B, output_size) f32
    """
    layers = params["lstm"]
    num_layers = len(layers)
    B, S, I = x_bsf.shape
    O = params["fc"]["w_t"].shape[1]

    # Free (no-copy) reshape — no separate transpose kernel is dispatched
    # before the pallas_call; row b*S+t == x[b, t, :].
    x2d = x_bsf.reshape(B * S, I)

    flat_inputs = [x2d]
    for layer in layers:
        flat_inputs += [layer["w_ih_t"], layer["w_hh_t"], layer["bias"]]
    flat_inputs += [params["fc"]["w_t"], params["fc"]["b"]]
    in_specs = [pl.BlockSpec(a.shape, lambda: (0, 0)) for a in flat_inputs]

    kernel = functools.partial(fused_lstm_fc_kernel, num_layers, S, B)

    # NOTE(v7x scaling): a grid-less call pins all work to one TensorCore and
    # assumes everything fits VMEM.  When B grows, add a leading batch-tile
    # grid axis with dimension_semantics=("parallel",) so each of v7x's two
    # TCs runs part of the batch.  When H grows, re-budget against v7x's
    # 64 MiB VMEM: bf16 weights (already done) and, past ~H=2048/layer,
    # stream weights per layer with pltpu.emit_pipeline instead of keeping
    # the whole model resident.
    return pl.pallas_call(
        kernel,
        out_shape=jax.ShapeDtypeStruct((B, O), jnp.float32),
        in_specs=in_specs,
        out_specs=pl.BlockSpec((B, O), lambda: (0, 0)),
    )(*flat_inputs)


# -------------------------- deterministic params -----------------------------

def init_params(key, input_size, hidden_size, num_layers, output_size):
    """Deterministic init mirroring PyTorch's U(-1/sqrt(H), 1/sqrt(H)).

    Weights are stored in bf16 (MXU-native); biases stay f32.
    """
    bound = 1.0 / jnp.sqrt(jnp.float32(hidden_size))
    lstm_layers = []
    in_sz = input_size
    for _ in range(num_layers):
        key, k1, k2, k3, k4 = jax.random.split(key, 5)
        w_ih = jax.random.uniform(k1, (4 * hidden_size, in_sz), jnp.float32, -bound, bound)
        w_hh = jax.random.uniform(k2, (4 * hidden_size, hidden_size), jnp.float32, -bound, bound)
        b_ih = jax.random.uniform(k3, (4 * hidden_size,), jnp.float32, -bound, bound)
        b_hh = jax.random.uniform(k4, (4 * hidden_size,), jnp.float32, -bound, bound)
        lstm_layers.append({
            "w_ih_t": w_ih.T.astype(jnp.bfloat16),     # (in, 4H)  gate order i,f,g,o
            "w_hh_t": w_hh.T.astype(jnp.bfloat16),     # (H, 4H)
            "bias": (b_ih + b_hh).reshape(1, -1),      # (1, 4H)   f32
        })
        in_sz = hidden_size
    key, k5, k6 = jax.random.split(key, 3)
    w_fc = jax.random.uniform(k5, (output_size, hidden_size), jnp.float32, -bound, bound)
    b_fc = jax.random.uniform(k6, (output_size,), jnp.float32, -bound, bound)
    return {"lstm": lstm_layers,
            "fc": {"w_t": w_fc.T.astype(jnp.bfloat16), "b": b_fc.reshape(1, -1)}}


# ----------------------------- pure-JAX reference ----------------------------

def reference_forward(x_bsf, params):
    """f32 reference using the SAME (bf16-stored) weights, cast up to f32.

    The only difference vs. the kernel is the kernel's bf16 cast of x/h at the
    MXU boundary — an expected small precision delta.
    """
    x = jnp.transpose(x_bsf, (1, 0, 2))
    for layer in params["lstm"]:
        w_ih = layer["w_ih_t"].astype(jnp.float32)
        w_hh = layer["w_hh_t"].astype(jnp.float32)
        b = layer["bias"]
        S, B, _ = x.shape
        H = w_hh.shape[0]
        h = jnp.zeros((B, H), jnp.float32)
        c = jnp.zeros((B, H), jnp.float32)
        outs = []
        for t in range(S):
            gates = x[t] @ w_ih + h @ w_hh + b
            i = jax.nn.sigmoid(gates[:, 0 * H:1 * H])
            f = jax.nn.sigmoid(gates[:, 1 * H:2 * H])
            g = jnp.tanh(gates[:, 2 * H:3 * H])
            o = jax.nn.sigmoid(gates[:, 3 * H:4 * H])
            c = f * c + i * g
            h = o * jnp.tanh(c)
            outs.append(h)
        x = jnp.stack(outs, axis=0)
    return x[-1] @ params["fc"]["w_t"].astype(jnp.float32) + params["fc"]["b"]


# ----------------------------------- main ------------------------------------

if __name__ == "__main__":
    input_size, hidden_size, num_layers, output_size = 16, 32, 2, 4
    batch, seq = 2, 8

    key = jax.random.PRNGKey(0)
    key, pkey, xkey = jax.random.split(key, 3)
    params = init_params(pkey, input_size, hidden_size, num_layers, output_size)
    x = jax.random.normal(xkey, (batch, seq, input_size), jnp.float32)

    out = lstm_model_forward(x, params)
    out = jax.block_until_ready(out)

    ref = reference_forward(x, params)
    assert out.shape == (batch, output_size)
    # bf16 activations at the MXU boundary => slightly looser tolerance.
    assert jnp.allclose(out, ref, atol=2e-2, rtol=2e-2), "mismatch vs reference"

    print("KERNEL_OK")
</pallas_src>

<mosaic_0001>
module attributes {stable_mosaic.version = 11 : i64} {
  func.func @fused_lstm_fc_kernel(%arg0: memref<16x16xf32, #tpu.memory_space<vmem>>, %arg1: memref<16x128xbf16, #tpu.memory_space<vmem>>, %arg2: memref<32x128xbf16, #tpu.memory_space<vmem>>, %arg3: memref<1x128xf32, #tpu.memory_space<vmem>>, %arg4: memref<32x128xbf16, #tpu.memory_space<vmem>>, %arg5: memref<32x128xbf16, #tpu.memory_space<vmem>>, %arg6: memref<1x128xf32, #tpu.memory_space<vmem>>, %arg7: memref<32x4xbf16, #tpu.memory_space<vmem>>, %arg8: memref<1x4xf32, #tpu.memory_space<vmem>>, %arg9: memref<2x4xf32, #tpu.memory_space<vmem>>) attributes {dimension_semantics = [], scalar_prefetch = 0 : i64, scratch_operands = 0 : i64, tpu.core_type = #tpu.core_type<tc>} {
    %c0 = arith.constant 0 : index
    %c0_0 = arith.constant 0 : index
    %0 = vector.load %arg1[%c0, %c0_0] : memref<16x128xbf16, #tpu.memory_space<vmem>>, vector<16x128xbf16>
    %c0_1 = arith.constant 0 : index
    %c0_2 = arith.constant 0 : index
    %1 = vector.load %arg4[%c0_1, %c0_2] : memref<32x128xbf16, #tpu.memory_space<vmem>>, vector<32x128xbf16>
    %c0_3 = arith.constant 0 : index
    %c0_4 = arith.constant 0 : index
    %2 = vector.load %arg2[%c0_3, %c0_4] : memref<32x128xbf16, #tpu.memory_space<vmem>>, vector<32x128xbf16>
    %c0_5 = arith.constant 0 : index
    %c0_6 = arith.constant 0 : index
    %3 = vector.load %arg5[%c0_5, %c0_6] : memref<32x128xbf16, #tpu.memory_space<vmem>>, vector<32x128xbf16>
    %c0_7 = arith.constant 0 : index
    %c0_8 = arith.constant 0 : index
    %4 = vector.load %arg3[%c0_7, %c0_8] : memref<1x128xf32, #tpu.memory_space<vmem>>, vector<1x128xf32>
    %c0_9 = arith.constant 0 : index
    %c0_10 = arith.constant 0 : index
    %5 = vector.load %arg6[%c0_9, %c0_10] : memref<1x128xf32, #tpu.memory_space<vmem>>, vector<1x128xf32>
    %6 = tpu.iota {dimensions = array<i32: 1>} : vector<2x128xi32>
    %c64_i32 = arith.constant 64 : i32
    %7 = vector.broadcast %c64_i32 : i32 to vector<2x128xi32>
    %8 = arith.cmpi sge, %6, %7 : vector<2x128xi32>
    %c96_i32 = arith.constant 96 : i32
    %9 = vector.broadcast %c96_i32 : i32 to vector<2x128xi32>
    %10 = arith.cmpi slt, %6, %9 : vector<2x128xi32>
    %11 = arith.andi %8, %10 : vector<2x128xi1>
    %cst = arith.constant 1.000000e+00 : f32
    %cst_11 = arith.constant 5.000000e-01 : f32
    %12 = vector.broadcast %cst : f32 to vector<2x128xf32>
    %13 = vector.broadcast %cst_11 : f32 to vector<2x128xf32>
    %14 = arith.select %11, %12, %13 : vector<2x128xi1>, vector<2x128xf32>
    %c0_12 = arith.constant 0 : index
    %c0_13 = arith.constant 0 : index
    %15 = vector.load %arg0[%c0_12, %c0_13] : memref<16x16xf32, #tpu.memory_space<vmem>>, vector<16x16xf32>
    %16 = arith.truncf %15 : vector<16x16xf32> to vector<16x16xbf16>
    %cst_14 = arith.constant dense<0.000000e+00> : vector<16x128xf32>
    %17 = tpu.matmul %16, %0, %cst_14 {dimension_numbers = #tpu.dot_dimension_numbers<[1], [0], [0], [1], [0, 0, 1, 1], [], []>} : vector<16x16xbf16>, vector<16x128xbf16>, vector<16x128xf32> -> vector<16x128xf32>
    %18 = vector.broadcast %4 : vector<1x128xf32> to vector<16x128xf32>
    %19 = arith.addf %17, %18 : vector<16x128xf32>
    %20 = vector.extract_strided_slice %19 {offsets = [0, 0], sizes = [1, 128], strides = [1, 1]} : vector<16x128xf32> to vector<1x128xf32>
    %21 = vector.extract_strided_slice %19 {offsets = [8, 0], sizes = [1, 128], strides = [1, 1]} : vector<16x128xf32> to vector<1x128xf32>
    %22 = tpu.concatenate %20, %21 in 0 : vector<1x128xf32>, vector<1x128xf32> -> vector<2x128xf32>
    %23 = vector.extract_strided_slice %19 {offsets = [1, 0], sizes = [1, 128], strides = [1, 1]} : vector<16x128xf32> to vector<1x128xf32>
    %24 = vector.extract_strided_slice %19 {offsets = [9, 0], sizes = [1, 128], strides = [1, 1]} : vector<16x128xf32> to vector<1x128xf32>
    %25 = tpu.concatenate %23, %24 in 0 : vector<1x128xf32>, vector<1x128xf32> -> vector<2x128xf32>
    %26 = vector.extract_strided_slice %19 {offsets = [2, 0], sizes = [1, 128], strides = [1, 1]} : vector<16x128xf32> to vector<1x128xf32>
    %27 = vector.extract_strided_slice %19 {offsets = [10, 0], sizes = [1, 128], strides = [1, 1]} : vector<16x128xf32> to vector<1x128xf32>
    %28 = tpu.concatenate %26, %27 in 0 : vector<1x128xf32>, vector<1x128xf32> -> vector<2x128xf32>
    %29 = vector.extract_strided_slice %19 {offsets = [3, 0], sizes = [1, 128], strides = [1, 1]} : vector<16x128xf32> to vector<1x128xf32>
    %30 = vector.extract_strided_slice %19 {offsets = [11, 0], sizes = [1, 128], strides = [1, 1]} : vector<16x128xf32> to vector<1x128xf32>
    %31 = tpu.concatenate %29, %30 in 0 : vector<1x128xf32>, vector<1x128xf32> -> vector<2x128xf32>
    %32 = vector.extract_strided_slice %19 {offsets = [4, 0], sizes = [1, 128], strides = [1, 1]} : vector<16x128xf32> to vector<1x128xf32>
    %33 = vector.extract_strided_slice %19 {offsets = [12, 0], sizes = [1, 128], strides = [1, 1]} : vector<16x128xf32> to vector<1x128xf32>
    %34 = tpu.concatenate %32, %33 in 0 : vector<1x128xf32>, vector<1x128xf32> -> vector<2x128xf32>
    %35 = vector.extract_strided_slice %19 {offsets = [5, 0], sizes = [1, 128], strides = [1, 1]} : vector<16x128xf32> to vector<1x128xf32>
    %36 = vector.extract_strided_slice %19 {offsets = [13, 0], sizes = [1, 128], strides = [1, 1]} : vector<16x128xf32> to vector<1x128xf32>
    %37 = tpu.concatenate %35, %36 in 0 : vector<1x128xf32>, vector<1x128xf32> -> vector<2x128xf32>
    %38 = vector.extract_strided_slice %19 {offsets = [6, 0], sizes = [1, 128], strides = [1, 1]} : vector<16x128xf32> to vector<1x128xf32>
    %39 = vector.extract_strided_slice %19 {offsets = [14, 0], sizes = [1, 128], strides = [1, 1]} : vector<16x128xf32> to vector<1x128xf32>
    %40 = tpu.concatenate %38, %39 in 0 : vector<1x128xf32>, vector<1x128xf32> -> vector<2x128xf32>
    %41 = vector.extract_strided_slice %19 {offsets = [7, 0], sizes = [1, 128], strides = [1, 1]} : vector<16x128xf32> to vector<1x128xf32>
    %42 = vector.extract_strided_slice %19 {offsets = [15, 0], sizes = [1, 128], strides = [1, 1]} : vector<16x128xf32> to vector<1x128xf32>
    %43 = tpu.concatenate %41, %42 in 0 : vector<1x128xf32>, vector<1x128xf32> -> vector<2x128xf32>
    %cst_15 = arith.constant 0.000000e+00 : f32
    %44 = vector.broadcast %cst_15 : f32 to vector<2x32xf32>
    %cst_16 = arith.constant 0.000000e+00 : f32
    %45 = vector.broadcast %cst_16 : f32 to vector<2x32xf32>
    %cst_17 = arith.constant 0.000000e+00 : f32
    %46 = vector.broadcast %cst_17 : f32 to vector<2x32xf32>
    %cst_18 = arith.constant 0.000000e+00 : f32
    %47 = vector.broadcast %cst_18 : f32 to vector<2x32xf32>
    %48 = arith.truncf %44 : vector<2x32xf32> to vector<2x32xbf16>
    %cst_19 = arith.constant dense<0.000000e+00> : vector<2x128xf32>
    %49 = tpu.matmul %48, %2, %cst_19 {dimension_numbers = #tpu.dot_dimension_numbers<[1], [0], [0], [1], [0, 0, 1, 1], [], []>} : vector<2x32xbf16>, vector<32x128xbf16>, vector<2x128xf32> -> vector<2x128xf32>
    %50 = arith.addf %22, %49 : vector<2x128xf32>
    %51 = arith.mulf %50, %14 : vector<2x128xf32>
    %52 = math.tanh %51 : vector<2x128xf32>
    %cst_20 = arith.constant 5.000000e-01 : f32
    %53 = vector.broadcast %cst_20 : f32 to vector<2x128xf32>
    %54 = arith.mulf %53, %52 : vector<2x128xf32>
    %cst_21 = arith.constant 5.000000e-01 : f32
    %55 = vector.broadcast %cst_21 : f32 to vector<2x128xf32>
    %56 = arith.addf %54, %55 : vector<2x128xf32>
    %57 = arith.select %11, %52, %56 : vector<2x128xi1>, vector<2x128xf32>
    %58 = vector.extract_strided_slice %57 {offsets = [0, 0], sizes = [2, 32], strides = [1, 1]} : vector<2x128xf32> to vector<2x32xf32>
    %59 = vector.extract_strided_slice %57 {offsets = [0, 32], sizes = [2, 32], strides = [1, 1]} : vector<2x128xf32> to vector<2x32xf32>
    %60 = vector.extract_strided_slice %57 {offsets = [0, 64], sizes = [2, 32], strides = [1, 1]} : vector<2x128xf32> to vector<2x32xf32>
    %61 = vector.extract_strided_slice %57 {offsets = [0, 96], sizes = [2, 32], strides = [1, 1]} : vector<2x128xf32> to vector<2x32xf32>
    %62 = arith.mulf %59, %46 : vector<2x32xf32>
    %63 = arith.mulf %58, %60 : vector<2x32xf32>
    %64 = arith.addf %62, %63 : vector<2x32xf32>
    %65 = math.tanh %64 : vector<2x32xf32>
    %66 = arith.mulf %61, %65 : vector<2x32xf32>
    %67 = arith.truncf %66 : vector<2x32xf32> to vector<2x32xbf16>
    %cst_22 = arith.constant dense<0.000000e+00> : vector<2x128xf32>
    %68 = tpu.matmul %67, %1, %cst_22 {dimension_numbers = #tpu.dot_dimension_numbers<[1], [0], [0], [1], [0, 0, 1, 1], [], []>} : vector<2x32xbf16>, vector<32x128xbf16>, vector<2x128xf32> -> vector<2x128xf32>
    %69 = arith.truncf %45 : vector<2x32xf32> to vector<2x32xbf16>
    %cst_23 = arith.constant dense<0.000000e+00> : vector<2x128xf32>
    %70 = tpu.matmul %69, %3, %cst_23 {dimension_numbers = #tpu.dot_dimension_numbers<[1], [0], [0], [1], [0, 0, 1, 1], [], []>} : vector<2x32xbf16>, vector<32x128xbf16>, vector<2x128xf32> -> vector<2x128xf32>
    %71 = arith.addf %68, %70 : vector<2x128xf32>
    %72 = vector.broadcast %5 : vector<1x128xf32> to vector<2x128xf32>
    %73 = arith.addf %71, %72 : vector<2x128xf32>
    %74 = arith.mulf %73, %14 : vector<2x128xf32>
    %75 = math.tanh %74 : vector<2x128xf32>
    %cst_24 = arith.constant 5.000000e-01 : f32
    %76 = vector.broadcast %cst_24 : f32 to vector<2x128xf32>
    %77 = arith.mulf %76, %75 : vector<2x128xf32>
    %cst_25 = arith.constant 5.000000e-01 : f32
    %78 = vector.broadcast %cst_25 : f32 to vector<2x128xf32>
    %79 = arith.addf %77, %78 : vector<2x128xf32>
    %80 = arith.select %11, %75, %79 : vector<2x128xi1>, vector<2x128xf32>
    %81 = vector.extract_strided_slice %80 {offsets = [0, 0], sizes = [2, 32], strides = [1, 1]} : vector<2x128xf32> to vector<2x32xf32>
    %82 = vector.extract_strided_slice %80 {offsets = [0, 32], sizes = [2, 32], strides = [1, 1]} : vector<2x128xf32> to vector<2x32xf32>
    %83 = vector.extract_strided_slice %80 {offsets = [0, 64], sizes = [2, 32], strides = [1, 1]} : vector<2x128xf32> to vector<2x32xf32>
    %84 = vector.extract_strided_slice %80 {offsets = [0, 96], sizes = [2, 32], strides = [1, 1]} : vector<2x128xf32> to vector<2x32xf32>
    %85 = arith.mulf %82, %47 : vector<2x32xf32>
    %86 = arith.mulf %81, %83 : vector<2x32xf32>
    %87 = arith.addf %85, %86 : vector<2x32xf32>
    %88 = math.tanh %87 : vector<2x32xf32>
    %89 = arith.mulf %84, %88 : vector<2x32xf32>
    %90 = arith.truncf %66 : vector<2x32xf32> to vector<2x32xbf16>
    %cst_26 = arith.constant dense<0.000000e+00> : vector<2x128xf32>
    %91 = tpu.matmul %90, %2, %cst_26 {dimension_numbers = #tpu.dot_dimension_numbers<[1], [0], [0], [1], [0, 0, 1, 1], [], []>} : vector<2x32xbf16>, vector<32x128xbf16>, vector<2x128xf32> -> vector<2x128xf32>
    %92 = arith.addf %25, %91 : vector<2x128xf32>
    %93 = arith.mulf %92, %14 : vector<2x128xf32>
    %94 = math.tanh %93 : vector<2x128xf32>
    %cst_27 = arith.constant 5.000000e-01 : f32
    %95 = vector.broadcast %cst_27 : f32 to vector<2x128xf32>
    %96 = arith.mulf %95, %94 : vector<2x128xf32>
    %cst_28 = arith.constant 5.000000e-01 : f32
    %97 = vector.broadcast %cst_28 : f32 to vector<2x128xf32>
    %98 = arith.addf %96, %97 : vector<2x128xf32>
    %99 = arith.select %11, %94, %98 : vector<2x128xi1>, vector<2x128xf32>
    %100 = vector.extract_strided_slice %99 {offsets = [0, 0], sizes = [2, 32], strides = [1, 1]} : vector<2x128xf32> to vector<2x32xf32>
    %101 = vector.extract_strided_slice %99 {offsets = [0, 32], sizes = [2, 32], strides = [1, 1]} : vector<2x128xf32> to vector<2x32xf32>
    %102 = vector.extract_strided_slice %99 {offsets = [0, 64], sizes = [2, 32], strides = [1, 1]} : vector<2x128xf32> to vector<2x32xf32>
    %103 = vector.extract_strided_slice %99 {offsets = [0, 96], sizes = [2, 32], strides = [1, 1]} : vector<2x128xf32> to vector<2x32xf32>
    %104 = arith.mulf %101, %64 : vector<2x32xf32>
    %105 = arith.mulf %100, %102 : vector<2x32xf32>
    %106 = arith.addf %104, %105 : vector<2x32xf32>
    %107 = math.tanh %106 : vector<2x32xf32>
    %108 = arith.mulf %103, %107 : vector<2x32xf32>
    %109 = arith.truncf %108 : vector<2x32xf32> to vector<2x32xbf16>
    %cst_29 = arith.constant dense<0.000000e+00> : vector<2x128xf32>
    %110 = tpu.matmul %109, %1, %cst_29 {dimension_numbers = #tpu.dot_dimension_numbers<[1], [0], [0], [1], [0, 0, 1, 1], [], []>} : vector<2x32xbf16>, vector<32x128xbf16>, vector<2x128xf32> -> vector<2x128xf32>
    %111 = arith.truncf %89 : vector<2x32xf32> to vector<2x32xbf16>
    %cst_30 = arith.constant dense<0.000000e+00> : vector<2x128xf32>
    %112 = tpu.matmul %111, %3, %cst_30 {dimension_numbers = #tpu.dot_dimension_numbers<[1], [0], [0], [1], [0, 0, 1, 1], [], []>} : vector<2x32xbf16>, vector<32x128xbf16>, vector<2x128xf32> -> vector<2x128xf32>
    %113 = arith.addf %110, %112 : vector<2x128xf32>
    %114 = vector.broadcast %5 : vector<1x128xf32> to vector<2x128xf32>
    %115 = arith.addf %113, %114 : vector<2x128xf32>
    %116 = arith.mulf %115, %14 : vector<2x128xf32>
    %117 = math.tanh %116 : vector<2x128xf32>
    %cst_31 = arith.constant 5.000000e-01 : f32
    %118 = vector.broadcast %cst_31 : f32 to vector<2x128xf32>
    %119 = arith.mulf %118, %117 : vector<2x128xf32>
    %cst_32 = arith.constant 5.000000e-01 : f32
    %120 = vector.broadcast %cst_32 : f32 to vector<2x128xf32>
    %121 = arith.addf %119, %120 : vector<2x128xf32>
    %122 = arith.select %11, %117, %121 : vector<2x128xi1>, vector<2x128xf32>
    %123 = vector.extract_strided_slice %122 {offsets = [0, 0], sizes = [2, 32], strides = [1, 1]} : vector<2x128xf32> to vector<2x32xf32>
    %124 = vector.extract_strided_slice %122 {offsets = [0, 32], sizes = [2, 32], strides = [1, 1]} : vector<2x128xf32> to vector<2x32xf32>
    %125 = vector.extract_strided_slice %122 {offsets = [0, 64], sizes = [2, 32], strides = [1, 1]} : vector<2x128xf32> to vector<2x32xf32>
    %126 = vector.extract_strided_slice %122 {offsets = [0, 96], sizes = [2, 32], strides = [1, 1]} : vector<2x128xf32> to vector<2x32xf32>
    %127 = arith.mulf %124, %87 : vector<2x32xf32>
    %128 = arith.mulf %123, %125 : vector<2x32xf32>
    %129 = arith.addf %127, %128 : vector<2x32xf32>
    %130 = math.tanh %129 : vector<2x32xf32>
    %131 = arith.mulf %126, %130 : vector<2x32xf32>
    %132 = arith.truncf %108 : vector<2x32xf32> to vector<2x32xbf16>
    %cst_33 = arith.constant dense<0.000000e+00> : vector<2x128xf32>
    %133 = tpu.matmul %132, %2, %cst_33 {dimension_numbers = #tpu.dot_dimension_numbers<[1], [0], [0], [1], [0, 0, 1, 1], [], []>} : vector<2x32xbf16>, vector<32x128xbf16>, vector<2x128xf32> -> vector<2x128xf32>
    %134 = arith.addf %28, %133 : vector<2x128xf32>
    %135 = arith.mulf %134, %14 : vector<2x128xf32>
    %136 = math.tanh %135 : vector<2x128xf32>
    %cst_34 = arith.constant 5.000000e-01 : f32
    %137 = vector.broadcast %cst_34 : f32 to vector<2x128xf32>
    %138 = arith.mulf %137, %136 : vector<2x128xf32>
    %cst_35 = arith.constant 5.000000e-01 : f32
    %139 = vector.broadcast %cst_35 : f32 to vector<2x128xf32>
    %140 = arith.addf %138, %139 : vector<2x128xf32>
    %141 = arith.select %11, %136, %140 : vector<2x128xi1>, vector<2x128xf32>
    %142 = vector.extract_strided_slice %141 {offsets = [0, 0], sizes = [2, 32], strides = [1, 1]} : vector<2x128xf32> to vector<2x32xf32>
    %143 = vector.extract_strided_slice %141 {offsets = [0, 32], sizes = [2, 32], strides = [1, 1]} : vector<2x128xf32> to vector<2x32xf32>
    %144 = vector.extract_strided_slice %141 {offsets = [0, 64], sizes = [2, 32], strides = [1, 1]} : vector<2x128xf32> to vector<2x32xf32>
    %145 = vector.extract_strided_slice %141 {offsets = [0, 96], sizes = [2, 32], strides = [1, 1]} : vector<2x128xf32> to vector<2x32xf32>
    %146 = arith.mulf %143, %106 : vector<2x32xf32>
    %147 = arith.mulf %142, %144 : vector<2x32xf32>
    %148 = arith.addf %146, %147 : vector<2x32xf32>
    %149 = math.tanh %148 : vector<2x32xf32>
    %150 = arith.mulf %145, %149 : vector<2x32xf32>
    %151 = arith.truncf %150 : vector<2x32xf32> to vector<2x32xbf16>
    %cst_36 = arith.constant dense<0.000000e+00> : vector<2x128xf32>
    %152 = tpu.matmul %151, %1, %cst_36 {dimension_numbers = #tpu.dot_dimension_numbers<[1], [0], [0], [1], [0, 0, 1, 1], [], []>} : vector<2x32xbf16>, vector<32x128xbf16>, vector<2x128xf32> -> vector<2x128xf32>
    %153 = arith.truncf %131 : vector<2x32xf32> to vector<2x32xbf16>
    %cst_37 = arith.constant dense<0.000000e+00> : vector<2x128xf32>
    %154 = tpu.matmul %153, %3, %cst_37 {dimension_numbers = #tpu.dot_dimension_numbers<[1], [0], [0], [1], [0, 0, 1, 1], [], []>} : vector<2x32xbf16>, vector<32x128xbf16>, vector<2x128xf32> -> vector<2x128xf32>
    %155 = arith.addf %152, %154 : vector<2x128xf32>
    %156 = vector.broadcast %5 : vector<1x128xf32> to vector<2x128xf32>
    %157 = arith.addf %155, %156 : vector<2x128xf32>
    %158 = arith.mulf %157, %14 : vector<2x128xf32>
    %159 = math.tanh %158 : vector<2x128xf32>
    %cst_38 = arith.constant 5.000000e-01 : f32
    %160 = vector.broadcast %cst_38 : f32 to vector<2x128xf32>
    %161 = arith.mulf %160, %159 : vector<2x128xf32>
    %cst_39 = arith.constant 5.000000e-01 : f32
    %162 = vector.broadcast %cst_39 : f32 to vector<2x128xf32>
    %163 = arith.addf %161, %162 : vector<2x128xf32>
    %164 = arith.select %11, %159, %163 : vector<2x128xi1>, vector<2x128xf32>
    %165 = vector.extract_strided_slice %164 {offsets = [0, 0], sizes = [2, 32], strides = [1, 1]} : vector<2x128xf32> to vector<2x32xf32>
    %166 = vector.extract_strided_slice %164 {offsets = [0, 32], sizes = [2, 32], strides = [1, 1]} : vector<2x128xf32> to vector<2x32xf32>
    %167 = vector.extract_strided_slice %164 {offsets = [0, 64], sizes = [2, 32], strides = [1, 1]} : vector<2x128xf32> to vector<2x32xf32>
    %168 = vector.extract_strided_slice %164 {offsets = [0, 96], sizes = [2, 32], strides = [1, 1]} : vector<2x128xf32> to vector<2x32xf32>
    %169 = arith.mulf %166, %129 : vector<2x32xf32>
    %170 = arith.mulf %165, %167 : vector<2x32xf32>
    %171 = arith.addf %169, %170 : vector<2x32xf32>
    %172 = math.tanh %171 : vector<2x32xf32>
    %173 = arith.mulf %168, %172 : vector<2x32xf32>
    %174 = arith.truncf %150 : vector<2x32xf32> to vector<2x32xbf16>
    %cst_40 = arith.constant dense<0.000000e+00> : vector<2x128xf32>
    %175 = tpu.matmul %174, %2, %cst_40 {dimension_numbers = #tpu.dot_dimension_numbers<[1], [0], [0], [1], [0, 0, 1, 1], [], []>} : vector<2x32xbf16>, vector<32x128xbf16>, vector<2x128xf32> -> vector<2x128xf32>
    %176 = arith.addf %31, %175 : vector<2x128xf32>
    %177 = arith.mulf %176, %14 : vector<2x128xf32>
    %178 = math.tanh %177 : vector<2x128xf32>
    %cst_41 = arith.constant 5.000000e-01 : f32
    %179 = vector.broadcast %cst_41 : f32 to vector<2x128xf32>
    %180 = arith.mulf %179, %178 : vector<2x128xf32>
    %cst_42 = arith.constant 5.000000e-01 : f32
    %181 = vector.broadcast %cst_42 : f32 to vector<2x128xf32>
    %182 = arith.addf %180, %181 : vector<2x128xf32>
    %183 = arith.select %11, %178, %182 : vector<2x128xi1>, vector<2x128xf32>
    %184 = vector.extract_strided_slice %183 {offsets = [0, 0], sizes = [2, 32], strides = [1, 1]} : vector<2x128xf32> to vector<2x32xf32>
    %185 = vector.extract_strided_slice %183 {offsets = [0, 32], sizes = [2, 32], strides = [1, 1]} : vector<2x128xf32> to vector<2x32xf32>
    %186 = vector.extract_strided_slice %183 {offsets = [0, 64], sizes = [2, 32], strides = [1, 1]} : vector<2x128xf32> to vector<2x32xf32>
    %187 = vector.extract_strided_slice %183 {offsets = [0, 96], sizes = [2, 32], strides = [1, 1]} : vector<2x128xf32> to vector<2x32xf32>
    %188 = arith.mulf %185, %148 : vector<2x32xf32>
    %189 = arith.mulf %184, %186 : vector<2x32xf32>
    %190 = arith.addf %188, %189 : vector<2x32xf32>
    %191 = math.tanh %190 : vector<2x32xf32>
    %192 = arith.mulf %187, %191 : vector<2x32xf32>
    %193 = arith.truncf %192 : vector<2x32xf32> to vector<2x32xbf16>
    %cst_43 = arith.constant dense<0.000000e+00> : vector<2x128xf32>
    %194 = tpu.matmul %193, %1, %cst_43 {dimension_numbers = #tpu.dot_dimension_numbers<[1], [0], [0], [1], [0, 0, 1, 1], [], []>} : vector<2x32xbf16>, vector<32x128xbf16>, vector<2x128xf32> -> vector<2x128xf32>
    %195 = arith.truncf %173 : vector<2x32xf32> to vector<2x32xbf16>
    %cst_44 = arith.constant dense<0.000000e+00> : vector<2x128xf32>
    %196 = tpu.matmul %195, %3, %cst_44 {dimension_numbers = #tpu.dot_dimension_numbers<[1], [0], [0], [1], [0, 0, 1, 1], [], []>} : vector<2x32xbf16>, vector<32x128xbf16>, vector<2x128xf32> -> vector<2x128xf32>
    %197 = arith.addf %194, %196 : vector<2x128xf32>
    %198 = vector.broadcast %5 : vector<1x128xf32> to vector<2x128xf32>
    %199 = arith.addf %197, %198 : vector<2x128xf32>
    %200 = arith.mulf %199, %14 : vector<2x128xf32>
    %201 = math.tanh %200 : vector<2x128xf32>
    %cst_45 = arith.constant 5.000000e-01 : f32
    %202 = vector.broadcast %cst_45 : f32 to vector<2x128xf32>
    %203 = arith.mulf %202, %201 : vector<2x128xf32>
    %cst_46 = arith.constant 5.000000e-01 : f32
    %204 = vector.broadcast %cst_46 : f32 to vector<2x128xf32>
    %205 = arith.addf %203, %204 : vector<2x128xf32>
    %206 = arith.select %11, %201, %205 : vector<2x128xi1>, vector<2x128xf32>
    %207 = vector.extract_strided_slice %206 {offsets = [0, 0], sizes = [2, 32], strides = [1, 1]} : vector<2x128xf32> to vector<2x32xf32>
    %208 = vector.extract_strided_slice %206 {offsets = [0, 32], sizes = [2, 32], strides = [1, 1]} : vector<2x128xf32> to vector<2x32xf32>
    %209 = vector.extract_strided_slice %206 {offsets = [0, 64], sizes = [2, 32], strides = [1, 1]} : vector<2x128xf32> to vector<2x32xf32>
    %210 = vector.extract_strided_slice %206 {offsets = [0, 96], sizes = [2, 32], strides = [1, 1]} : vector<2x128xf32> to vector<2x32xf32>
    %211 = arith.mulf %208, %171 : vector<2x32xf32>
    %212 = arith.mulf %207, %209 : vector<2x32xf32>
    %213 = arith.addf %211, %212 : vector<2x32xf32>
    %214 = math.tanh %213 : vector<2x32xf32>
    %215 = arith.mulf %210, %214 : vector<2x32xf32>
    %216 = arith.truncf %192 : vector<2x32xf32> to vector<2x32xbf16>
    %cst_47 = arith.constant dense<0.000000e+00> : vector<2x128xf32>
    %217 = tpu.matmul %216, %2, %cst_47 {dimension_numbers = #tpu.dot_dimension_numbers<[1], [0], [0], [1], [0, 0, 1, 1], [], []>} : vector<2x32xbf16>, vector<32x128xbf16>, vector<2x128xf32> -> vector<2x128xf32>
    %218 = arith.addf %34, %217 : vector<2x128xf32>
    %219 = arith.mulf %218, %14 : vector<2x128xf32>
    %220 = math.tanh %219 : vector<2x128xf32>
    %cst_48 = arith.constant 5.000000e-01 : f32
    %221 = vector.broadcast %cst_48 : f32 to vector<2x128xf32>
    %222 = arith.mulf %221, %220 : vector<2x128xf32>
    %cst_49 = arith.constant 5.000000e-01 : f32
    %223 = vector.broadcast %cst_49 : f32 to vector<2x128xf32>
    %224 = arith.addf %222, %223 : vector<2x128xf32>
    %225 = arith.select %11, %220, %224 : vector<2x128xi1>, vector<2x128xf32>
    %226 = vector.extract_strided_slice %225 {offsets = [0, 0], sizes = [2, 32], strides = [1, 1]} : vector<2x128xf32> to vector<2x32xf32>
    %227 = vector.extract_strided_slice %225 {offsets = [0, 32], sizes = [2, 32], strides = [1, 1]} : vector<2x128xf32> to vector<2x32xf32>
    %228 = vector.extract_strided_slice %225 {offsets = [0, 64], sizes = [2, 32], strides = [1, 1]} : vector<2x128xf32> to vector<2x32xf32>
    %229 = vector.extract_strided_slice %225 {offsets = [0, 96], sizes = [2, 32], strides = [1, 1]} : vector<2x128xf32> to vector<2x32xf32>
    %230 = arith.mulf %227, %190 : vector<2x32xf32>
    %231 = arith.mulf %226, %228 : vector<2x32xf32>
    %232 = arith.addf %230, %231 : vector<2x32xf32>
    %233 = math.tanh %232 : vector<2x32xf32>
    %234 = arith.mulf %229, %233 : vector<2x32xf32>
    %235 = arith.truncf %234 : vector<2x32xf32> to vector<2x32xbf16>
    %cst_50 = arith.constant dense<0.000000e+00> : vector<2x128xf32>
    %236 = tpu.matmul %235, %1, %cst_50 {dimension_numbers = #tpu.dot_dimension_numbers<[1], [0], [0], [1], [0, 0, 1, 1], [], []>} : vector<2x32xbf16>, vector<32x128xbf16>, vector<2x128xf32> -> vector<2x128xf32>
    %237 = arith.truncf %215 : vector<2x32xf32> to vector<2x32xbf16>
    %cst_51 = arith.constant dense<0.000000e+00> : vector<2x128xf32>
    %238 = tpu.matmul %237, %3, %cst_51 {dimension_numbers = #tpu.dot_dimension_numbers<[1], [0], [0], [1], [0, 0, 1, 1], [], []>} : vector<2x32xbf16>, vector<32x128xbf16>, vector<2x128xf32> -> vector<2x128xf32>
    %239 = arith.addf %236, %238 : vector<2x128xf32>
    %240 = vector.broadcast %5 : vector<1x128xf32> to vector<2x128xf32>
    %241 = arith.addf %239, %240 : vector<2x128xf32>
    %242 = arith.mulf %241, %14 : vector<2x128xf32>
    %243 = math.tanh %242 : vector<2x128xf32>
    %cst_52 = arith.constant 5.000000e-01 : f32
    %244 = vector.broadcast %cst_52 : f32 to vector<2x128xf32>
    %245 = arith.mulf %244, %243 : vector<2x128xf32>
    %cst_53 = arith.constant 5.000000e-01 : f32
    %246 = vector.broadcast %cst_53 : f32 to vector<2x128xf32>
    %247 = arith.addf %245, %246 : vector<2x128xf32>
    %248 = arith.select %11, %243, %247 : vector<2x128xi1>, vector<2x128xf32>
    %249 = vector.extract_strided_slice %248 {offsets = [0, 0], sizes = [2, 32], strides = [1, 1]} : vector<2x128xf32> to vector<2x32xf32>
    %250 = vector.extract_strided_slice %248 {offsets = [0, 32], sizes = [2, 32], strides = [1, 1]} : vector<2x128xf32> to vector<2x32xf32>
    %251 = vector.extract_strided_slice %248 {offsets = [0, 64], sizes = [2, 32], strides = [1, 1]} : vector<2x128xf32> to vector<2x32xf32>
    %252 = vector.extract_strided_slice %248 {offsets = [0, 96], sizes = [2, 32], strides = [1, 1]} : vector<2x128xf32> to vector<2x32xf32>
    %253 = arith.mulf %250, %213 : vector<2x32xf32>
    %254 = arith.mulf %249, %251 : vector<2x32xf32>
    %255 = arith.addf %253, %254 : vector<2x32xf32>
    %256 = math.tanh %255 : vector<2x32xf32>
    %257 = arith.mulf %252, %256 : vector<2x32xf32>
    %258 = arith.truncf %234 : vector<2x32xf32> to vector<2x32xbf16>
    %cst_54 = arith.constant dense<0.000000e+00> : vector<2x128xf32>
    %259 = tpu.matmul %258, %2, %cst_54 {dimension_numbers = #tpu.dot_dimension_numbers<[1], [0], [0], [1], [0, 0, 1, 1], [], []>} : vector<2x32xbf16>, vector<32x128xbf16>, vector<2x128xf32> -> vector<2x128xf32>
    %260 = arith.addf %37, %259 : vector<2x128xf32>
    %261 = arith.mulf %260, %14 : vector<2x128xf32>
    %262 = math.tanh %261 : vector<2x128xf32>
    %cst_55 = arith.constant 5.000000e-01 : f32
    %263 = vector.broadcast %cst_55 : f32 to vector<2x128xf32>
    %264 = arith.mulf %263, %262 : vector<2x128xf32>
    %cst_56 = arith.constant 5.000000e-01 : f32
    %265 = vector.broadcast %cst_56 : f32 to vector<2x128xf32>
    %266 = arith.addf %264, %265 : vector<2x128xf32>
    %267 = arith.select %11, %262, %266 : vector<2x128xi1>, vector<2x128xf32>
    %268 = vector.extract_strided_slice %267 {offsets = [0, 0], sizes = [2, 32], strides = [1, 1]} : vector<2x128xf32> to vector<2x32xf32>
    %269 = vector.extract_strided_slice %267 {offsets = [0, 32], sizes = [2, 32], strides = [1, 1]} : vector<2x128xf32> to vector<2x32xf32>
    %270 = vector.extract_strided_slice %267 {offsets = [0, 64], sizes = [2, 32], strides = [1, 1]} : vector<2x128xf32> to vector<2x32xf32>
    %271 = vector.extract_strided_slice %267 {offsets = [0, 96], sizes = [2, 32], strides = [1, 1]} : vector<2x128xf32> to vector<2x32xf32>
    %272 = arith.mulf %269, %232 : vector<2x32xf32>
    %273 = arith.mulf %268, %270 : vector<2x32xf32>
    %274 = arith.addf %272, %273 : vector<2x32xf32>
    %275 = math.tanh %274 : vector<2x32xf32>
    %276 = arith.mulf %271, %275 : vector<2x32xf32>
    %277 = arith.truncf %276 : vector<2x32xf32> to vector<2x32xbf16>
    %cst_57 = arith.constant dense<0.000000e+00> : vector<2x128xf32>
    %278 = tpu.matmul %277, %1, %cst_57 {dimension_numbers = #tpu.dot_dimension_numbers<[1], [0], [0], [1], [0, 0, 1, 1], [], []>} : vector<2x32xbf16>, vector<32x128xbf16>, vector<2x128xf32> -> vector<2x128xf32>
    %279 = arith.truncf %257 : vector<2x32xf32> to vector<2x32xbf16>
    %cst_58 = arith.constant dense<0.000000e+00> : vector<2x128xf32>
    %280 = tpu.matmul %279, %3, %cst_58 {dimension_numbers = #tpu.dot_dimension_numbers<[1], [0], [0], [1], [0, 0, 1, 1], [], []>} : vector<2x32xbf16>, vector<32x128xbf16>, vector<2x128xf32> -> vector<2x128xf32>
    %281 = arith.addf %278, %280 : vector<2x128xf32>
    %282 = vector.broadcast %5 : vector<1x128xf32> to vector<2x128xf32>
    %283 = arith.addf %281, %282 : vector<2x128xf32>
    %284 = arith.mulf %283, %14 : vector<2x128xf32>
    %285 = math.tanh %284 : vector<2x128xf32>
    %cst_59 = arith.constant 5.000000e-01 : f32
    %286 = vector.broadcast %cst_59 : f32 to vector<2x128xf32>
    %287 = arith.mulf %286, %285 : vector<2x128xf32>
    %cst_60 = arith.constant 5.000000e-01 : f32
    %288 = vector.broadcast %cst_60 : f32 to vector<2x128xf32>
    %289 = arith.addf %287, %288 : vector<2x128xf32>
    %290 = arith.select %11, %285, %289 : vector<2x128xi1>, vector<2x128xf32>
    %291 = vector.extract_strided_slice %290 {offsets = [0, 0], sizes = [2, 32], strides = [1, 1]} : vector<2x128xf32> to vector<2x32xf32>
    %292 = vector.extract_strided_slice %290 {offsets = [0, 32], sizes = [2, 32], strides = [1, 1]} : vector<2x128xf32> to vector<2x32xf32>
    %293 = vector.extract_strided_slice %290 {offsets = [0, 64], sizes = [2, 32], strides = [1, 1]} : vector<2x128xf32> to vector<2x32xf32>
    %294 = vector.extract_strided_slice %290 {offsets = [0, 96], sizes = [2, 32], strides = [1, 1]} : vector<2x128xf32> to vector<2x32xf32>
    %295 = arith.mulf %292, %255 : vector<2x32xf32>
    %296 = arith.mulf %291, %293 : vector<2x32xf32>
    %297 = arith.addf %295, %296 : vector<2x32xf32>
    %298 = math.tanh %297 : vector<2x32xf32>
    %299 = arith.mulf %294, %298 : vector<2x32xf32>
    %300 = arith.truncf %276 : vector<2x32xf32> to vector<2x32xbf16>
    %cst_61 = arith.constant dense<0.000000e+00> : vector<2x128xf32>
    %301 = tpu.matmul %300, %2, %cst_61 {dimension_numbers = #tpu.dot_dimension_numbers<[1], [0], [0], [1], [0, 0, 1, 1], [], []>} : vector<2x32xbf16>, vector<32x128xbf16>, vector<2x128xf32> -> vector<2x128xf32>
    %302 = arith.addf %40, %301 : vector<2x128xf32>
    %303 = arith.mulf %302, %14 : vector<2x128xf32>
    %304 = math.tanh %303 : vector<2x128xf32>
    %cst_62 = arith.constant 5.000000e-01 : f32
    %305 = vector.broadcast %cst_62 : f32 to vector<2x128xf32>
    %306 = arith.mulf %305, %304 : vector<2x128xf32>
    %cst_63 = arith.constant 5.000000e-01 : f32
    %307 = vector.broadcast %cst_63 : f32 to vector<2x128xf32>
    %308 = arith.addf %306, %307 : vector<2x128xf32>
    %309 = arith.select %11, %304, %308 : vector<2x128xi1>, vector<2x128xf32>
    %310 = vector.extract_strided_slice %309 {offsets = [0, 0], sizes = [2, 32], strides = [1, 1]} : vector<2x128xf32> to vector<2x32xf32>
    %311 = vector.extract_strided_slice %309 {offsets = [0, 32], sizes = [2, 32], strides = [1, 1]} : vector<2x128xf32> to vector<2x32xf32>
    %312 = vector.extract_strided_slice %309 {offsets = [0, 64], sizes = [2, 32], strides = [1, 1]} : vector<2x128xf32> to vector<2x32xf32>
    %313 = vector.extract_strided_slice %309 {offsets = [0, 96], sizes = [2, 32], strides = [1, 1]} : vector<2x128xf32> to vector<2x32xf32>
    %314 = arith.mulf %311, %274 : vector<2x32xf32>
    %315 = arith.mulf %310, %312 : vector<2x32xf32>
    %316 = arith.addf %314, %315 : vector<2x32xf32>
    %317 = math.tanh %316 : vector<2x32xf32>
    %318 = arith.mulf %313, %317 : vector<2x32xf32>
    %319 = arith.truncf %318 : vector<2x32xf32> to vector<2x32xbf16>
    %cst_64 = arith.constant dense<0.000000e+00> : vector<2x128xf32>
    %320 = tpu.matmul %319, %1, %cst_64 {dimension_numbers = #tpu.dot_dimension_numbers<[1], [0], [0], [1], [0, 0, 1, 1], [], []>} : vector<2x32xbf16>, vector<32x128xbf16>, vector<2x128xf32> -> vector<2x128xf32>
    %321 = arith.truncf %299 : vector<2x32xf32> to vector<2x32xbf16>
    %cst_65 = arith.constant dense<0.000000e+00> : vector<2x128xf32>
    %322 = tpu.matmul %321, %3, %cst_65 {dimension_numbers = #tpu.dot_dimension_numbers<[1], [0], [0], [1], [0, 0, 1, 1], [], []>} : vector<2x32xbf16>, vector<32x128xbf16>, vector<2x128xf32> -> vector<2x128xf32>
    %323 = arith.addf %320, %322 : vector<2x128xf32>
    %324 = vector.broadcast %5 : vector<1x128xf32> to vector<2x128xf32>
    %325 = arith.addf %323, %324 : vector<2x128xf32>
    %326 = arith.mulf %325, %14 : vector<2x128xf32>
    %327 = math.tanh %326 : vector<2x128xf32>
    %cst_66 = arith.constant 5.000000e-01 : f32
    %328 = vector.broadcast %cst_66 : f32 to vector<2x128xf32>
    %329 = arith.mulf %328, %327 : vector<2x128xf32>
    %cst_67 = arith.constant 5.000000e-01 : f32
    %330 = vector.broadcast %cst_67 : f32 to vector<2x128xf32>
    %331 = arith.addf %329, %330 : vector<2x128xf32>
    %332 = arith.select %11, %327, %331 : vector<2x128xi1>, vector<2x128xf32>
    %333 = vector.extract_strided_slice %332 {offsets = [0, 0], sizes = [2, 32], strides = [1, 1]} : vector<2x128xf32> to vector<2x32xf32>
    %334 = vector.extract_strided_slice %332 {offsets = [0, 32], sizes = [2, 32], strides = [1, 1]} : vector<2x128xf32> to vector<2x32xf32>
    %335 = vector.extract_strided_slice %332 {offsets = [0, 64], sizes = [2, 32], strides = [1, 1]} : vector<2x128xf32> to vector<2x32xf32>
    %336 = vector.extract_strided_slice %332 {offsets = [0, 96], sizes = [2, 32], strides = [1, 1]} : vector<2x128xf32> to vector<2x32xf32>
    %337 = arith.mulf %334, %297 : vector<2x32xf32>
    %338 = arith.mulf %333, %335 : vector<2x32xf32>
    %339 = arith.addf %337, %338 : vector<2x32xf32>
    %340 = math.tanh %339 : vector<2x32xf32>
    %341 = arith.mulf %336, %340 : vector<2x32xf32>
    %342 = arith.truncf %318 : vector<2x32xf32> to vector<2x32xbf16>
    %cst_68 = arith.constant dense<0.000000e+00> : vector<2x128xf32>
    %343 = tpu.matmul %342, %2, %cst_68 {dimension_numbers = #tpu.dot_dimension_numbers<[1], [0], [0], [1], [0, 0, 1, 1], [], []>} : vector<2x32xbf16>, vector<32x128xbf16>, vector<2x128xf32> -> vector<2x128xf32>
    %344 = arith.addf %43, %343 : vector<2x128xf32>
    %345 = arith.mulf %344, %14 : vector<2x128xf32>
    %346 = math.tanh %345 : vector<2x128xf32>
    %cst_69 = arith.constant 5.000000e-01 : f32
    %347 = vector.broadcast %cst_69 : f32 to vector<2x128xf32>
    %348 = arith.mulf %347, %346 : vector<2x128xf32>
    %cst_70 = arith.constant 5.000000e-01 : f32
    %349 = vector.broadcast %cst_70 : f32 to vector<2x128xf32>
    %350 = arith.addf %348, %349 : vector<2x128xf32>
    %351 = arith.select %11, %346, %350 : vector<2x128xi1>, vector<2x128xf32>
    %352 = vector.extract_strided_slice %351 {offsets = [0, 0], sizes = [2, 32], strides = [1, 1]} : vector<2x128xf32> to vector<2x32xf32>
    %353 = vector.extract_strided_slice %351 {offsets = [0, 32], sizes = [2, 32], strides = [1, 1]} : vector<2x128xf32> to vector<2x32xf32>
    %354 = vector.extract_strided_slice %351 {offsets = [0, 64], sizes = [2, 32], strides = [1, 1]} : vector<2x128xf32> to vector<2x32xf32>
    %355 = vector.extract_strided_slice %351 {offsets = [0, 96], sizes = [2, 32], strides = [1, 1]} : vector<2x128xf32> to vector<2x32xf32>
    %356 = arith.mulf %353, %316 : vector<2x32xf32>
    %357 = arith.mulf %352, %354 : vector<2x32xf32>
    %358 = arith.addf %356, %357 : vector<2x32xf32>
    %359 = math.tanh %358 : vector<2x32xf32>
    %360 = arith.mulf %355, %359 : vector<2x32xf32>
    %361 = arith.truncf %360 : vector<2x32xf32> to vector<2x32xbf16>
    %cst_71 = arith.constant dense<0.000000e+00> : vector<2x128xf32>
    %362 = tpu.matmul %361, %1, %cst_71 {dimension_numbers = #tpu.dot_dimension_numbers<[1], [0], [0], [1], [0, 0, 1, 1], [], []>} : vector<2x32xbf16>, vector<32x128xbf16>, vector<2x128xf32> -> vector<2x128xf32>
    %363 = arith.truncf %341 : vector<2x32xf32> to vector<2x32xbf16>
    %cst_72 = arith.constant dense<0.000000e+00> : vector<2x128xf32>
    %364 = tpu.matmul %363, %3, %cst_72 {dimension_numbers = #tpu.dot_dimension_numbers<[1], [0], [0], [1], [0, 0, 1, 1], [], []>} : vector<2x32xbf16>, vector<32x128xbf16>, vector<2x128xf32> -> vector<2x128xf32>
    %365 = arith.addf %362, %364 : vector<2x128xf32>
    %366 = vector.broadcast %5 : vector<1x128xf32> to vector<2x128xf32>
    %367 = arith.addf %365, %366 : vector<2x128xf32>
    %368 = arith.mulf %367, %14 : vector<2x128xf32>
    %369 = math.tanh %368 : vector<2x128xf32>
    %cst_73 = arith.constant 5.000000e-01 : f32
    %370 = vector.broadcast %cst_73 : f32 to vector<2x128xf32>
    %371 = arith.mulf %370, %369 : vector<2x128xf32>
    %cst_74 = arith.constant 5.000000e-01 : f32
    %372 = vector.broadcast %cst_74 : f32 to vector<2x128xf32>
    %373 = arith.addf %371, %372 : vector<2x128xf32>
    %374 = arith.select %11, %369, %373 : vector<2x128xi1>, vector<2x128xf32>
    %375 = vector.extract_strided_slice %374 {offsets = [0, 0], sizes = [2, 32], strides = [1, 1]} : vector<2x128xf32> to vector<2x32xf32>
    %376 = vector.extract_strided_slice %374 {offsets = [0, 32], sizes = [2, 32], strides = [1, 1]} : vector<2x128xf32> to vector<2x32xf32>
    %377 = vector.extract_strided_slice %374 {offsets = [0, 64], sizes = [2, 32], strides = [1, 1]} : vector<2x128xf32> to vector<2x32xf32>
    %378 = vector.extract_strided_slice %374 {offsets = [0, 96], sizes = [2, 32], strides = [1, 1]} : vector<2x128xf32> to vector<2x32xf32>
    %379 = arith.mulf %376, %339 : vector<2x32xf32>
    %380 = arith.mulf %375, %377 : vector<2x32xf32>
    %381 = arith.addf %379, %380 : vector<2x32xf32>
    %382 = math.tanh %381 : vector<2x32xf32>
    %383 = arith.mulf %378, %382 : vector<2x32xf32>
    %384 = arith.truncf %383 : vector<2x32xf32> to vector<2x32xbf16>
    %c0_75 = arith.constant 0 : index
    %c0_76 = arith.constant 0 : index
    %385 = vector.load %arg7[%c0_75, %c0_76] : memref<32x4xbf16, #tpu.memory_space<vmem>>, vector<32x4xbf16>
    %cst_77 = arith.constant dense<0.000000e+00> : vector<2x4xf32>
    %386 = tpu.matmul %384, %385, %cst_77 {dimension_numbers = #tpu.dot_dimension_numbers<[1], [0], [0], [1], [0, 0, 1, 1], [], []>} : vector<2x32xbf16>, vector<32x4xbf16>, vector<2x4xf32> -> vector<2x4xf32>
    %c0_78 = arith.constant 0 : index
    %c0_79 = arith.constant 0 : index
    %387 = vector.load %arg8[%c0_78, %c0_79] : memref<1x4xf32, #tpu.memory_space<vmem>>, vector<1x4xf32>
    %388 = vector.broadcast %387 : vector<1x4xf32> to vector<2x4xf32>
    %389 = arith.addf %386, %388 : vector<2x4xf32>
    %c0_80 = arith.constant 0 : index
    %c0_81 = arith.constant 0 : index
    %390 = vector.load %arg9[%c0_80, %c0_81] : memref<2x4xf32, #tpu.memory_space<vmem>>, vector<2x4xf32>
    tpu.vector_store %arg9[%c0_80, %c0_81], %389 {strides = array<i32>} : memref<2x4xf32, #tpu.memory_space<vmem>>, vector<2x4xf32>,
    return
  }
}

</mosaic_0001>

<llo_original>
// kernel: lstm_model_forward.1
$region0: #{lstm_model_forward.1}
  #allocation0 [shape = 'u32[]', space=smem, size = 0x4, offset = 0x4, fixed_abs, tag = 'smem constant byte address 0x4 - core index']
  #allocation1 [shape = 'u32[144,128]{1,0:T(1,128)}', space=vmem, size = 0x12000, scoped, tag = 'internal scratch']
  %s0 = inlined_call_operand.vmem [shape: f32[16,16], index: 0, kind: input, shape index: {}]
  %s1 = inlined_call_operand.hbm [shape: bf16[16,128], index: 1, kind: input, shape index: {}]
  %s2 = inlined_call_operand.vmem [shape: bf16[32,128], index: 2, kind: input, shape index: {}]
  %s3 = inlined_call_operand.hbm [shape: f32[1,128], index: 3, kind: input, shape index: {}]
  %s4 = inlined_call_operand.vmem [shape: bf16[32,128], index: 4, kind: input, shape index: {}]
  %s5 = inlined_call_operand.hbm [shape: bf16[32,128], index: 5, kind: input, shape index: {}]
  %s6 = inlined_call_operand.hbm [shape: f32[1,128], index: 6, kind: input, shape index: {}]
  %s7 = inlined_call_operand.vmem [shape: bf16[32,4], index: 7, kind: input, shape index: {}]
  %s8 = inlined_call_operand.hbm [shape: f32[1,4], index: 8, kind: input, shape index: {}]
  %s9 = inlined_call_operand.hbm [shape: f32[2,4], index: 9, kind: output, shape index: {}]
  %s10 = sld [smem:[#allocation0]]
  $region66: #{lstm_model_forward.1} parent=0
    _
  %s12 = ssub.s32 1, %s10
  %s13 = scalar_select 0, %s12, %s10
  $region1: #{lstm_model_forward.1} parent=0
    #allocation2 [shape = 'u8[4096]{0}', space=vmem, size = 0x1000, scoped, tag = 'input window, operand 1, single buffered']
    #allocation3 [shape = 's32[1]{0}', space=sflag, size = 0x4, scoped, tag = 'scoped memory for lstm_model_forward.1']
    #allocation4 [shape = 's32[1]{0}', space=sflag, size = 0x4, scoped, tag = 'scoped memory for lstm_model_forward.1']
    #allocation5 [shape = 'u8[512]{0}', space=vmem, size = 0x400, scoped, tag = 'input window, operand 3, single buffered']
    #allocation6 [shape = 's32[1]{0}', space=sflag, size = 0x4, scoped, tag = 'scoped memory for lstm_model_forward.1']
    #allocation7 [shape = 'u8[8192]{0}', space=vmem, size = 0x2000, scoped, tag = 'input window, operand 5, single buffered']
    #allocation8 [shape = 'u8[512]{0}', space=vmem, size = 0x400, scoped, tag = 'input window, operand 6, single buffered']
    #allocation9 [shape = 's32[1]{0}', space=sflag, size = 0x4, scoped, tag = 'scoped memory for lstm_model_forward.1']
    #allocation10 [shape = 'u8[512]{0}', space=vmem, size = 0x400, scoped, tag = 'input window, operand 8, single buffered']
    #allocation11 [shape = 'u8[1024]{0}', space=vmem, size = 0x400, scoped, tag = 'output window, operand 0, single buffered']
    %14 = vsyncpa [#allocation3], 0
    %15 = vsyncpa [#allocation6], 0
    %16 = vsyncpa [#allocation9], 0
    %17 = vsyncpa [#allocation4], 0
    // Predicated region
    $region2: #{lstm_model_forward.1} parent=1 // pred_check
      _
    $region3: #{lstm_model_forward.1} parent=1 // pred_check_branch
      %19 = sbr.rel (0) target = $region5
    $region4: #{lstm_model_forward.1} parent=1 // pred_region
      _
    $region5: #{lstm_model_forward.1} parent=1 // pred_fallthru
      _
    // Predicated region
    $region6: #{lstm_model_forward.1} parent=1 // pred_check
      _
    $region7: #{lstm_model_forward.1} parent=1 // pred_check_branch
      %21 = sbr.rel (0) target = $region9
    $region8: #{lstm_model_forward.1} parent=1 // pred_region
      %s23 = ssub.s32 128, 128
      %24 = vsyncadd [#allocation3], %s23
      %s25 = sshll.u32 [#allocation2], 4
      %s26 = int_to_ptr.vmem [resolvable:$true] %s25
      %31 = dma.hbm_to_vmem [thread:$0]  %s1, 128, %s26, [#allocation3], 64, 64, 4
    $region9: #{lstm_model_forward.1} parent=1 // pred_fallthru
      _
    // Predicated region
    $region10: #{lstm_model_forward.1} parent=1 // pred_check
      _
    $region11: #{lstm_model_forward.1} parent=1 // pred_check_branch
      %33 = sbr.rel (0) target = $region13
    $region12: #{lstm_model_forward.1} parent=1 // pred_region
      _
    $region13: #{lstm_model_forward.1} parent=1 // pred_fallthru
      _
    // Predicated region
    $region14: #{lstm_model_forward.1} parent=1 // pred_check
      _
    $region15: #{lstm_model_forward.1} parent=1 // pred_check_branch
      %35 = sbr.rel (0) target = $region17
    $region16: #{lstm_model_forward.1} parent=1 // pred_region
      %s37 = ssub.s32 16, 16
      %38 = vsyncadd [#allocation6], %s37
      %s40 = sshll.u32 [#allocation5], 4
      %s41 = int_to_ptr.vmem [resolvable:$true] %s40
      %43 = dma.hbm_to_vmem [thread:$0]  %s3, 16, %s41, [#allocation6]
    $region17: #{lstm_model_forward.1} parent=1 // pred_fallthru
      _
    // Predicated region
    $region18: #{lstm_model_forward.1} parent=1 // pred_check
      _
    $region19: #{lstm_model_forward.1} parent=1 // pred_check_branch
      %45 = sbr.rel (0) target = $region21
    $region20: #{lstm_model_forward.1} parent=1 // pred_region
      _
    $region21: #{lstm_model_forward.1} parent=1 // pred_fallthru
      _
    // Predicated region
    $region22: #{lstm_model_forward.1} parent=1 // pred_check
      _
    $region23: #{lstm_model_forward.1} parent=1 // pred_check_branch
      %47 = sbr.rel (0) target = $region25
    $region24: #{lstm_model_forward.1} parent=1 // pred_region
      %s49 = ssub.s32 256, 256
      %50 = vsyncadd [#allocation6], %s49
      %s51 = sshll.u32 [#allocation7], 4
      %s52 = int_to_ptr.vmem [resolvable:$true] %s51
      %57 = dma.hbm_to_vmem [thread:$0]  %s5, 256, %s52, [#allocation6], 64, 64, 4
    $region25: #{lstm_model_forward.1} parent=1 // pred_fallthru
      _
    // Predicated region
    $region26: #{lstm_model_forward.1} parent=1 // pred_check
      _
    $region27: #{lstm_model_forward.1} parent=1 // pred_check_branch
      %59 = sbr.rel (0) target = $region29
    $region28: #{lstm_model_forward.1} parent=1 // pred_region
      %s61 = ssub.s32 16, 16
      %62 = vsyncadd [#allocation9], %s61
      %s64 = sshll.u32 [#allocation8], 4
      %s65 = int_to_ptr.vmem [resolvable:$true] %s64
      %67 = dma.hbm_to_vmem [thread:$0]  %s6, 16, %s65, [#allocation9]
    $region29: #{lstm_model_forward.1} parent=1 // pred_fallthru
      _
    // Predicated region
    $region30: #{lstm_model_forward.1} parent=1 // pred_check
      _
    $region31: #{lstm_model_forward.1} parent=1 // pred_check_branch
      %69 = sbr.rel (0) target = $region33
    $region32: #{lstm_model_forward.1} parent=1 // pred_region
      _
    $region33: #{lstm_model_forward.1} parent=1 // pred_fallthru
      _
    // Predicated region
    $region34: #{lstm_model_forward.1} parent=1 // pred_check
      _
    $region35: #{lstm_model_forward.1} parent=1 // pred_check_branch
      %71 = sbr.rel (0) target = $region37
    $region36: #{lstm_model_forward.1} parent=1 // pred_region
      %s73 = ssub.s32 16, 16
      %74 = vsyncadd [#allocation9], %s73
      %s76 = sshll.u32 [#allocation10], 4
      %s77 = int_to_ptr.vmem [resolvable:$true] %s76
      %79 = dma.hbm_to_vmem [thread:$0]  %s8, 16, %s77, [#allocation9]
    $region37: #{lstm_model_forward.1} parent=1 // pred_fallthru
      _
    // Predicated region
    $region38: #{lstm_model_forward.1} parent=1 // pred_check
      _
    $region39: #{lstm_model_forward.1} parent=1 // pred_check_branch
      %81 = sbr.rel (0) target = $region41
    $region40: #{lstm_model_forward.1} parent=1 // pred_region
      %82 = dma.done [#allocation3], 128
    $region41: #{lstm_model_forward.1} parent=1 // pred_fallthru
      _
    // Predicated region
    $region42: #{lstm_model_forward.1} parent=1 // pred_check
      _
    $region43: #{lstm_model_forward.1} parent=1 // pred_check_branch
      %84 = sbr.rel (0) target = $region45
    $region44: #{lstm_model_forward.1} parent=1 // pred_region
      %85 = dma.done [#allocation6], 16
    $region45: #{lstm_model_forward.1} parent=1 // pred_fallthru
      _
    // Predicated region
    $region46: #{lstm_model_forward.1} parent=1 // pred_check
      _
    $region47: #{lstm_model_forward.1} parent=1 // pred_check_branch
      %87 = sbr.rel (0) target = $region49
    $region48: #{lstm_model_forward.1} parent=1 // pred_region
      %88 = dma.done [#allocation6], 256
    $region49: #{lstm_model_forward.1} parent=1 // pred_fallthru
      _
    // Predicated region
    $region50: #{lstm_model_forward.1} parent=1 // pred_check
      _
    $region51: #{lstm_model_forward.1} parent=1 // pred_check_branch
      %90 = sbr.rel (0) target = $region53
    $region52: #{lstm_model_forward.1} parent=1 // pred_region
      %91 = dma.done [#allocation9], 16
    $region53: #{lstm_model_forward.1} parent=1 // pred_fallthru
      _
    // Predicated region
    $region54: #{lstm_model_forward.1} parent=1 // pred_check
      _
    $region55: #{lstm_model_forward.1} parent=1 // pred_check_branch
      %93 = sbr.rel (0) target = $region57
    $region56: #{lstm_model_forward.1} parent=1 // pred_region
      %94 = dma.done [#allocation9], 16
    $region57: #{lstm_model_forward.1} parent=1 // pred_fallthru
      _
    %v96 = vld [vmem:[#allocation2] sm:$0xf]
    %v97 = vld [vmem:[#allocation2 + $0x4] sm:$0xf]
    %v98 = vld [vmem:[%s4] sm:$0xf]
    %v99 = vld [vmem:[%s4 + $0x4] sm:$0xf]
    %v100 = vld [vmem:[%s4 + $0x8] sm:$0xf]
    %v101 = vld [vmem:[%s4 + $0xc] sm:$0xf]
    %v102 = vld [vmem:[%s2] sm:$0xf]
    %v103 = vld [vmem:[%s2 + $0x4] sm:$0xf]
    %v104 = vld [vmem:[%s2 + $0x8] sm:$0xf]
    %v105 = vld [vmem:[%s2 + $0xc] sm:$0xf]
    %v106 = vld [vmem:[#allocation7] sm:$0xf]
    %v107 = vld [vmem:[#allocation7 + $0x4] sm:$0xf]
    %v108 = vld [vmem:[#allocation7 + $0x8] sm:$0xf]
    %v109 = vld [vmem:[#allocation7 + $0xc] sm:$0xf]
    %v110 = vld [vmem:[#allocation5] sm:$0x1]
    %v111 = vld [vmem:[#allocation8] sm:$0x1]
    %v112 = vlaneseq
    %v113 = vand.u32 %v112, 127
    %vm114 = vcmp.ge.s32.totalorder %v113, 64
    %vm115 = vcmp.lt.s32.totalorder %v113, 96
    %vm116 = vmand %vm114, %vm115
    %v117 = vsel %vm116, 1.0, 0.5
    %v118 = vld [vmem:[%s0] sm:$0xff]
    %v119 = vld [vmem:[%s0 + $0x8] sm:$0xff]
    %v120 = vpack.c.bf16 %v119, %v118
    %v122 = vlaneseq
    %v123 = vshrl.u32 %v122, 7
    %v124 = vsub.s32 0, %v123
    %v125 = vrot.slane %v110, %v124
    %v129 = vunpack.c.l.b16 %v96
    %v130 = vunpack.c.l.b16 %v97
    %v131 = vpack.c.b16 %v130, %v129
    %vm133 = vcmask 130048
    %v135 = vsel %vm133, %v120, 0
    %137 = vmatprep.subr.bf16.mxu0 0
    %138 = vmatpush1.bf16.msra.mxu0 %v131
    %139 = vmatprep.subr.bf16.mxu0 0
    %140 = vmatpush1.bf16.msra.mxu0 0
    %141 = vmatprep.subr.bf16.mxu0 0
    %142 = vmatpush1.bf16.msra.mxu0 0
    %143 = vmatprep.subr.bf16.mxu0 0
    %144 = vmatpush1.bf16.msra.mxu0 0
    %145 = vmatprep.subr.bf16.mxu0 0
    %146 = vmatpush1.bf16.msra.mxu0 0
    %147 = vmatprep.subr.bf16.mxu0 0
    %148 = vmatpush1.bf16.msra.mxu0 0
    %149 = vmatprep.subr.bf16.mxu0 0
    %150 = vmatpush1.bf16.msra.mxu0 0
    %151 = vmatprep.subr.bf16.mxu0 0
    %152 = vmatpush1.bf16.msra.mxu0 0
    %153 = vmatprep.subr.bf16.mxu0 0
    %154 = vmatpush1.bf16.msra.mxu0 0
    %155 = vmatprep.subr.bf16.mxu0 0
    %156 = vmatpush1.bf16.msra.mxu0 0
    %157 = vmatprep.subr.bf16.mxu0 0
    %158 = vmatpush1.bf16.msra.mxu0 0
    %159 = vmatprep.subr.bf16.mxu0 0
    %160 = vmatpush1.bf16.msra.mxu0 0
    %161 = vmatprep.subr.bf16.mxu0 0
    %162 = vmatpush1.bf16.msra.mxu0 0
    %163 = vmatprep.subr.bf16.mxu0 0
    %164 = vmatpush1.bf16.msra.mxu0 0
    %165 = vmatprep.subr.bf16.mxu0 0
    %166 = vmatpush1.bf16.msra.mxu0 0
    %167 = vmatprep.subr.bf16.mxu0 0
    %168 = vmatpush1.bf16.msra.mxu0 0
    %169 = vmatprep.mubr.bf16.mxu0 0
    %170 = vmatmul.mubr.bf16.gmra.mrb[0].mxu0 %v135
    %v171 = vpop.f32.mrb[0].mxu0
    %v172 = vadd.f32 %v125, %v171
    %v173 = vpop.f32.mrb[0].mxu0
    %v174 = vpop.f32.mrb[0].mxu0
    %v175 = vadd.f32 %v125, %v174
    %v176 = vpop.f32.mrb[0].mxu0
    %177 = vdwg.mxu0
    %v179 = vrot.slane %v175, 7
    %vm181 = vcmask 1040384
    %v182 = vsel %vm181, %v172, %v179
    %v184 = vrot.slane %v172, 1
    %v186 = vsel %vm181, %v184, %v175
    %v187 = vrot.slane %v172, 2
    %v189 = vrot.slane %v175, 1
    %v191 = vsel %vm181, %v187, %v189
    %v192 = vrot.slane %v172, 3
    %v194 = vrot.slane %v175, 2
    %v196 = vsel %vm181, %v192, %v194
    %v197 = vrot.slane %v172, 4
    %v199 = vrot.slane %v175, 3
    %v201 = vsel %vm181, %v197, %v199
    %v202 = vrot.slane %v172, 5
    %v204 = vrot.slane %v175, 4
    %v206 = vsel %vm181, %v202, %v204
    %v207 = vrot.slane %v172, 6
    %v209 = vrot.slane %v175, 5
    %v211 = vsel %vm181, %v207, %v209
    %v212 = vrot.slane %v172, 7
    %v214 = vrot.slane %v175, 6
    %v216 = vsel %vm181, %v212, %v214
    %v221 = vunpack.c.l.b16 %v102
    %v222 = vunpack.c.l.b16 %v103
    %v223 = vunpack.c.l.b16 %v104
    %v224 = vunpack.c.l.b16 %v105
    %v225 = vpack.c.b16 %v222, %v221
    %v226 = vpack.c.b16 %v224, %v223
    %vm229 = vcmask 261120
    %v231 = vsel %vm229, 0, 0
    %233 = vmatprep.subr.bf16.mxu0 0
    %234 = vmatpush1.bf16.msra.mxu0 %v225
    %235 = vmatprep.subr.bf16.mxu0 0
    %236 = vmatpush1.bf16.msra.mxu0 %v226
    %237 = vmatprep.subr.bf16.mxu0 0
    %238 = vmatpush1.bf16.msra.mxu0 0
    %239 = vmatprep.subr.bf16.mxu0 0
    %240 = vmatpush1.bf16.msra.mxu0 0
    %241 = vmatprep.subr.bf16.mxu0 0
    %242 = vmatpush1.bf16.msra.mxu0 0
    %243 = vmatprep.subr.bf16.mxu0 0
    %244 = vmatpush1.bf16.msra.mxu0 0
    %245 = vmatprep.subr.bf16.mxu0 0
    %246 = vmatpush1.bf16.msra.mxu0 0
    %247 = vmatprep.subr.bf16.mxu0 0
    %248 = vmatpush1.bf16.msra.mxu0 0
    %249 = vmatprep.subr.bf16.mxu0 0
    %250 = vmatpush1.bf16.msra.mxu0 0
    %251 = vmatprep.subr.bf16.mxu0 0
    %252 = vmatpush1.bf16.msra.mxu0 0
    %253 = vmatprep.subr.bf16.mxu0 0
    %254 = vmatpush1.bf16.msra.mxu0 0
    %255 = vmatprep.subr.bf16.mxu0 0
    %256 = vmatpush1.bf16.msra.mxu0 0
    %257 = vmatprep.subr.bf16.mxu0 0
    %258 = vmatpush1.bf16.msra.mxu0 0
    %259 = vmatprep.subr.bf16.mxu0 0
    %260 = vmatpush1.bf16.msra.mxu0 0
    %261 = vmatprep.subr.bf16.mxu0 0
    %262 = vmatpush1.bf16.msra.mxu0 0
    %263 = vmatprep.subr.bf16.mxu0 0
    %264 = vmatpush1.bf16.msra.mxu0 0
    %265 = vmatprep.mubr.bf16.mxu0 0
    %266 = vmatmul.mubr.bf16.gmra.mrb[0].mxu0 %v231
    %v267 = vpop.f32.mrb[0].mxu0
    %v268 = vadd.f32 0.0, %v267
    %v269 = vpop.f32.mrb[0].mxu0
    %v270 = vpop.f32.mrb[0].mxu0
    %v271 = vpop.f32.mrb[0].mxu0
    %272 = vdwg.mxu0
    %v273 = vadd.f32 %v182, %v268
    %v274 = vmul.f32 %v273, %v117
    %v275 = vtanh.pop %v274
    %v276 = vmul.f32 %v275, 0.5
    %v277 = vadd.f32 %v276, 0.5
    %v278 = vsel %vm116, %v275, %v277
    %v279 = vmul.f32 %v278, 0.0
    %281 = vrot.lane.b32.xlu0 %v278, 64
    %v282 = vpop.permute.xlu0 %281
    %v284 = vmul.f32 %v278, %v282
    %286 = vrot.lane.b32.xlu0 %v284, 32
    %v287 = vpop.permute.xlu0 %286
    %v289 = vadd.f32 %v279, %v287
    %v290 = vtanh.pop %v289
    %292 = vrot.lane.b32.xlu0 %v290, 64
    %v293 = vpop.permute.xlu0 %292
    %v295 = vmul.f32 %v278, %v293
    %v296 = vpack.c.bf16 %v295, %v295
    %v301 = vunpack.c.l.b16 %v106
    %v302 = vunpack.c.l.b16 %v107
    %v303 = vunpack.c.l.b16 %v108
    %v304 = vunpack.c.l.b16 %v109
    %v305 = vpack.c.b16 %v302, %v301
    %v306 = vpack.c.b16 %v304, %v303
    %309 = vmatprep.subr.bf16.mxu0 0
    %310 = vmatpush1.bf16.msra.mxu0 %v305
    %311 = vmatprep.subr.bf16.mxu0 0
    %312 = vmatpush1.bf16.msra.mxu0 %v306
    %313 = vmatprep.subr.bf16.mxu0 0
    %314 = vmatpush1.bf16.msra.mxu0 0
    %315 = vmatprep.subr.bf16.mxu0 0
    %316 = vmatpush1.bf16.msra.mxu0 0
    %317 = vmatprep.subr.bf16.mxu0 0
    %318 = vmatpush1.bf16.msra.mxu0 0
    %319 = vmatprep.subr.bf16.mxu0 0
    %320 = vmatpush1.bf16.msra.mxu0 0
    %321 = vmatprep.subr.bf16.mxu0 0
    %322 = vmatpush1.bf16.msra.mxu0 0
    %323 = vmatprep.subr.bf16.mxu0 0
    %324 = vmatpush1.bf16.msra.mxu0 0
    %325 = vmatprep.subr.bf16.mxu0 0
    %326 = vmatpush1.bf16.msra.mxu0 0
    %327 = vmatprep.subr.bf16.mxu0 0
    %328 = vmatpush1.bf16.msra.mxu0 0
    %329 = vmatprep.subr.bf16.mxu0 0
    %330 = vmatpush1.bf16.msra.mxu0 0
    %331 = vmatprep.subr.bf16.mxu0 0
    %332 = vmatpush1.bf16.msra.mxu0 0
    %333 = vmatprep.subr.bf16.mxu0 0
    %334 = vmatpush1.bf16.msra.mxu0 0
    %335 = vmatprep.subr.bf16.mxu0 0
    %336 = vmatpush1.bf16.msra.mxu0 0
    %337 = vmatprep.subr.bf16.mxu0 0
    %338 = vmatpush1.bf16.msra.mxu0 0
    %339 = vmatprep.subr.bf16.mxu0 0
    %340 = vmatpush1.bf16.msra.mxu0 0
    %341 = vmatprep.mubr.bf16.mxu0 0
    %342 = vmatmul.mubr.bf16.gmra.mrb[0].mxu0 %v231
    %v343 = vpop.f32.mrb[0].mxu0
    %v344 = vadd.f32 0.0, %v343
    %v345 = vpop.f32.mrb[0].mxu0
    %v346 = vpop.f32.mrb[0].mxu0
    %v347 = vpop.f32.mrb[0].mxu0
    %348 = vdwg.mxu0
    %350 = vrot.lane.b32.xlu0 %v296, 32
    %v351 = vpop.permute.xlu0 %350
    %v356 = vunpack.c.l.b16 %v98
    %v357 = vunpack.c.l.b16 %v99
    %v358 = vunpack.c.l.b16 %v100
    %v359 = vunpack.c.l.b16 %v101
    %v360 = vpack.c.b16 %v357, %v356
    %v361 = vpack.c.b16 %v359, %v358
    %v365 = vsel %vm229, %v351, 0
    %367 = vmatprep.subr.bf16.mxu0 0
    %368 = vmatpush1.bf16.msra.mxu0 %v360
    %369 = vmatprep.subr.bf16.mxu0 0
    %370 = vmatpush1.bf16.msra.mxu0 %v361
    %371 = vmatprep.subr.bf16.mxu0 0
    %372 = vmatpush1.bf16.msra.mxu0 0
    %373 = vmatprep.subr.bf16.mxu0 0
    %374 = vmatpush1.bf16.msra.mxu0 0
    %375 = vmatprep.subr.bf16.mxu0 0
    %376 = vmatpush1.bf16.msra.mxu0 0
    %377 = vmatprep.subr.bf16.mxu0 0
    %378 = vmatpush1.bf16.msra.mxu0 0
    %379 = vmatprep.subr.bf16.mxu0 0
    %380 = vmatpush1.bf16.msra.mxu0 0
    %381 = vmatprep.subr.bf16.mxu0 0
    %382 = vmatpush1.bf16.msra.mxu0 0
    %383 = vmatprep.subr.bf16.mxu0 0
    %384 = vmatpush1.bf16.msra.mxu0 0
    %385 = vmatprep.subr.bf16.mxu0 0
    %386 = vmatpush1.bf16.msra.mxu0 0
    %387 = vmatprep.subr.bf16.mxu0 0
    %388 = vmatpush1.bf16.msra.mxu0 0
    %389 = vmatprep.subr.bf16.mxu0 0
    %390 = vmatpush1.bf16.msra.mxu0 0
    %391 = vmatprep.subr.bf16.mxu0 0
    %392 = vmatpush1.bf16.msra.mxu0 0
    %393 = vmatprep.subr.bf16.mxu0 0
    %394 = vmatpush1.bf16.msra.mxu0 0
    %395 = vmatprep.subr.bf16.mxu0 0
    %396 = vmatpush1.bf16.msra.mxu0 0
    %397 = vmatprep.subr.bf16.mxu0 0
    %398 = vmatpush1.bf16.msra.mxu0 0
    %399 = vmatprep.mubr.bf16.mxu0 0
    %400 = vmatmul.mubr.bf16.gmra.mrb[0].mxu0 %v365
    %v401 = vpop.f32.mrb[0].mxu0
    %v402 = vadd.f32 %v344, %v401
    %v403 = vpop.f32.mrb[0].mxu0
    %v404 = vpop.f32.mrb[0].mxu0
    %v405 = vpop.f32.mrb[0].mxu0
    %406 = vdwg.mxu0
    %v408 = vlaneseq
    %v409 = vshrl.u32 %v408, 7
    %v410 = vsub.s32 0, %v409
    %v411 = vrot.slane %v111, %v410
    %v413 = vadd.f32 %v402, %v411
    %v414 = vmul.f32 %v413, %v117
    %v415 = vtanh.pop %v414
    %v416 = vmul.f32 %v415, 0.5
    %v417 = vadd.f32 %v416, 0.5
    %v418 = vsel %vm116, %v415, %v417
    %v419 = vmul.f32 %v418, 0.0
    %421 = vrot.lane.b32.xlu0 %v418, 64
    %v422 = vpop.permute.xlu0 %421
    %v424 = vmul.f32 %v418, %v422
    %426 = vrot.lane.b32.xlu0 %v424, 32
    %v427 = vpop.permute.xlu0 %426
    %v429 = vadd.f32 %v419, %v427
    %v430 = vtanh.pop %v429
    %432 = vrot.lane.b32.xlu0 %v430, 64
    %v433 = vpop.permute.xlu0 %432
    %v435 = vmul.f32 %v418, %v433
    %436 = vmatprep.subr.bf16.mxu0 0
    %437 = vmatpush1.bf16.msra.mxu0 %v225
    %438 = vmatprep.subr.bf16.mxu0 0
    %439 = vmatpush1.bf16.msra.mxu0 %v226
    %440 = vmatprep.subr.bf16.mxu0 0
    %441 = vmatpush1.bf16.msra.mxu0 0
    %442 = vmatprep.subr.bf16.mxu0 0
    %443 = vmatpush1.bf16.msra.mxu0 0
    %444 = vmatprep.subr.bf16.mxu0 0
    %445 = vmatpush1.bf16.msra.mxu0 0
    %446 = vmatprep.subr.bf16.mxu0 0
    %447 = vmatpush1.bf16.msra.mxu0 0
    %448 = vmatprep.subr.bf16.mxu0 0
    %449 = vmatpush1.bf16.msra.mxu0 0
    %450 = vmatprep.subr.bf16.mxu0 0
    %451 = vmatpush1.bf16.msra.mxu0 0
    %452 = vmatprep.subr.bf16.mxu0 0
    %453 = vmatpush1.bf16.msra.mxu0 0
    %454 = vmatprep.subr.bf16.mxu0 0
    %455 = vmatpush1.bf16.msra.mxu0 0
    %456 = vmatprep.subr.bf16.mxu0 0
    %457 = vmatpush1.bf16.msra.mxu0 0
    %458 = vmatprep.subr.bf16.mxu0 0
    %459 = vmatpush1.bf16.msra.mxu0 0
    %460 = vmatprep.subr.bf16.mxu0 0
    %461 = vmatpush1.bf16.msra.mxu0 0
    %462 = vmatprep.subr.bf16.mxu0 0
    %463 = vmatpush1.bf16.msra.mxu0 0
    %464 = vmatprep.subr.bf16.mxu0 0
    %465 = vmatpush1.bf16.msra.mxu0 0
    %466 = vmatprep.subr.bf16.mxu0 0
    %467 = vmatpush1.bf16.msra.mxu0 0
    %468 = vmatprep.mubr.bf16.mxu0 0
    %469 = vmatmul.mubr.bf16.gmra.mrb[0].mxu0 %v365
    %v470 = vpop.f32.mrb[0].mxu0
    %v471 = vadd.f32 0.0, %v470
    %v472 = vpop.f32.mrb[0].mxu0
    %v473 = vpop.f32.mrb[0].mxu0
    %v474 = vpop.f32.mrb[0].mxu0
    %475 = vdwg.mxu0
    %v476 = vadd.f32 %v186, %v471
    %v477 = vmul.f32 %v476, %v117
    %v478 = vtanh.pop %v477
    %v479 = vmul.f32 %v478, 0.5
    %v480 = vadd.f32 %v479, 0.5
    %v481 = vsel %vm116, %v478, %v480
    %v482 = vmul.f32 %v481, %v289
    %484 = vrot.lane.b32.xlu0 %v481, 64
    %v485 = vpop.permute.xlu0 %484
    %v487 = vmul.f32 %v481, %v485
    %489 = vrot.lane.b32.xlu0 %v487, 32
    %v490 = vpop.permute.xlu0 %489
    %v492 = vadd.f32 %v482, %v490
    %v493 = vtanh.pop %v492
    %495 = vrot.lane.b32.xlu0 %v493, 64
    %v496 = vpop.permute.xlu0 %495
    %v498 = vmul.f32 %v481, %v496
    %v499 = vpack.c.bf16 %v498, %v498
    %v500 = vpack.c.bf16 %v435, %v435
    %502 = vrot.lane.b32.xlu0 %v500, 32
    %v503 = vpop.permute.xlu0 %502
    %v505 = vsel %vm229, %v503, 0
    %507 = vmatprep.subr.bf16.mxu0 0
    %508 = vmatpush1.bf16.msra.mxu0 %v305
    %509 = vmatprep.subr.bf16.mxu0 0
    %510 = vmatpush1.bf16.msra.mxu0 %v306
    %511 = vmatprep.subr.bf16.mxu0 0
    %512 = vmatpush1.bf16.msra.mxu0 0
    %513 = vmatprep.subr.bf16.mxu0 0
    %514 = vmatpush1.bf16.msra.mxu0 0
    %515 = vmatprep.subr.bf16.mxu0 0
    %516 = vmatpush1.bf16.msra.mxu0 0
    %517 = vmatprep.subr.bf16.mxu0 0
    %518 = vmatpush1.bf16.msra.mxu0 0
    %519 = vmatprep.subr.bf16.mxu0 0
    %520 = vmatpush1.bf16.msra.mxu0 0
    %521 = vmatprep.subr.bf16.mxu0 0
    %522 = vmatpush1.bf16.msra.mxu0 0
    %523 = vmatprep.subr.bf16.mxu0 0
    %524 = vmatpush1.bf16.msra.mxu0 0
    %525 = vmatprep.subr.bf16.mxu0 0
    %526 = vmatpush1.bf16.msra.mxu0 0
    %527 = vmatprep.subr.bf16.mxu0 0
    %528 = vmatpush1.bf16.msra.mxu0 0
    %529 = vmatprep.subr.bf16.mxu0 0
    %530 = vmatpush1.bf16.msra.mxu0 0
    %531 = vmatprep.subr.bf16.mxu0 0
    %532 = vmatpush1.bf16.msra.mxu0 0
    %533 = vmatprep.subr.bf16.mxu0 0
    %534 = vmatpush1.bf16.msra.mxu0 0
    %535 = vmatprep.subr.bf16.mxu0 0
    %536 = vmatpush1.bf16.msra.mxu0 0
    %537 = vmatprep.subr.bf16.mxu0 0
    %538 = vmatpush1.bf16.msra.mxu0 0
    %539 = vmatprep.mubr.bf16.mxu0 0
    %540 = vmatmul.mubr.bf16.gmra.mrb[0].mxu0 %v505
    %v541 = vpop.f32.mrb[0].mxu0
    %v542 = vadd.f32 0.0, %v541
    %v543 = vpop.f32.mrb[0].mxu0
    %v544 = vpop.f32.mrb[0].mxu0
    %v545 = vpop.f32.mrb[0].mxu0
    %546 = vdwg.mxu0
    %548 = vrot.lane.b32.xlu0 %v499, 32
    %v549 = vpop.permute.xlu0 %548
    %v551 = vsel %vm229, %v549, 0
    %553 = vmatprep.subr.bf16.mxu0 0
    %554 = vmatpush1.bf16.msra.mxu0 %v360
    %555 = vmatprep.subr.bf16.mxu0 0
    %556 = vmatpush1.bf16.msra.mxu0 %v361
    %557 = vmatprep.subr.bf16.mxu0 0
    %558 = vmatpush1.bf16.msra.mxu0 0
    %559 = vmatprep.subr.bf16.mxu0 0
    %560 = vmatpush1.bf16.msra.mxu0 0
    %561 = vmatprep.subr.bf16.mxu0 0
    %562 = vmatpush1.bf16.msra.mxu0 0
    %563 = vmatprep.subr.bf16.mxu0 0
    %564 = vmatpush1.bf16.msra.mxu0 0
    %565 = vmatprep.subr.bf16.mxu0 0
    %566 = vmatpush1.bf16.msra.mxu0 0
    %567 = vmatprep.subr.bf16.mxu0 0
    %568 = vmatpush1.bf16.msra.mxu0 0
    %569 = vmatprep.subr.bf16.mxu0 0
    %570 = vmatpush1.bf16.msra.mxu0 0
    %571 = vmatprep.subr.bf16.mxu0 0
    %572 = vmatpush1.bf16.msra.mxu0 0
    %573 = vmatprep.subr.bf16.mxu0 0
    %574 = vmatpush1.bf16.msra.mxu0 0
    %575 = vmatprep.subr.bf16.mxu0 0
    %576 = vmatpush1.bf16.msra.mxu0 0
    %577 = vmatprep.subr.bf16.mxu0 0
    %578 = vmatpush1.bf16.msra.mxu0 0
    %579 = vmatprep.subr.bf16.mxu0 0
    %580 = vmatpush1.bf16.msra.mxu0 0
    %581 = vmatprep.subr.bf16.mxu0 0
    %582 = vmatpush1.bf16.msra.mxu0 0
    %583 = vmatprep.subr.bf16.mxu0 0
    %584 = vmatpush1.bf16.msra.mxu0 0
    %585 = vmatprep.mubr.bf16.mxu0 0
    %586 = vmatmul.mubr.bf16.gmra.mrb[0].mxu0 %v551
    %v587 = vpop.f32.mrb[0].mxu0
    %v588 = vadd.f32 %v542, %v587
    %v589 = vpop.f32.mrb[0].mxu0
    %v590 = vpop.f32.mrb[0].mxu0
    %v591 = vpop.f32.mrb[0].mxu0
    %592 = vdwg.mxu0
    %v593 = vadd.f32 %v588, %v411
    %v594 = vmul.f32 %v593, %v117
    %v595 = vtanh.pop %v594
    %v596 = vmul.f32 %v595, 0.5
    %v597 = vadd.f32 %v596, 0.5
    %v598 = vsel %vm116, %v595, %v597
    %v599 = vmul.f32 %v598, %v429
    %601 = vrot.lane.b32.xlu0 %v598, 64
    %v602 = vpop.permute.xlu0 %601
    %v604 = vmul.f32 %v598, %v602
    %606 = vrot.lane.b32.xlu0 %v604, 32
    %v607 = vpop.permute.xlu0 %606
    %v609 = vadd.f32 %v599, %v607
    %v610 = vtanh.pop %v609
    %612 = vrot.lane.b32.xlu0 %v610, 64
    %v613 = vpop.permute.xlu0 %612
    %v615 = vmul.f32 %v598, %v613
    %616 = vmatprep.subr.bf16.mxu0 0
    %617 = vmatpush1.bf16.msra.mxu0 %v225
    %618 = vmatprep.subr.bf16.mxu0 0
    %619 = vmatpush1.bf16.msra.mxu0 %v226
    %620 = vmatprep.subr.bf16.mxu0 0
    %621 = vmatpush1.bf16.msra.mxu0 0
    %622 = vmatprep.subr.bf16.mxu0 0
    %623 = vmatpush1.bf16.msra.mxu0 0
    %624 = vmatprep.subr.bf16.mxu0 0
    %625 = vmatpush1.bf16.msra.mxu0 0
    %626 = vmatprep.subr.bf16.mxu0 0
    %627 = vmatpush1.bf16.msra.mxu0 0
    %628 = vmatprep.subr.bf16.mxu0 0
    %629 = vmatpush1.bf16.msra.mxu0 0
    %630 = vmatprep.subr.bf16.mxu0 0
    %631 = vmatpush1.bf16.msra.mxu0 0
    %632 = vmatprep.subr.bf16.mxu0 0
    %633 = vmatpush1.bf16.msra.mxu0 0
    %634 = vmatprep.subr.bf16.mxu0 0
    %635 = vmatpush1.bf16.msra.mxu0 0
    %636 = vmatprep.subr.bf16.mxu0 0
    %637 = vmatpush1.bf16.msra.mxu0 0
    %638 = vmatprep.subr.bf16.mxu0 0
    %639 = vmatpush1.bf16.msra.mxu0 0
    %640 = vmatprep.subr.bf16.mxu0 0
    %641 = vmatpush1.bf16.msra.mxu0 0
    %642 = vmatprep.subr.bf16.mxu0 0
    %643 = vmatpush1.bf16.msra.mxu0 0
    %644 = vmatprep.subr.bf16.mxu0 0
    %645 = vmatpush1.bf16.msra.mxu0 0
    %646 = vmatprep.subr.bf16.mxu0 0
    %647 = vmatpush1.bf16.msra.mxu0 0
    %648 = vmatprep.mubr.bf16.mxu0 0
    %649 = vmatmul.mubr.bf16.gmra.mrb[0].mxu0 %v551
    %v650 = vpop.f32.mrb[0].mxu0
    %v651 = vadd.f32 0.0, %v650
    %v652 = vpop.f32.mrb[0].mxu0
    %v653 = vpop.f32.mrb[0].mxu0
    %v654 = vpop.f32.mrb[0].mxu0
    %655 = vdwg.mxu0
    %v656 = vadd.f32 %v191, %v651
    %v657 = vmul.f32 %v656, %v117
    %v658 = vtanh.pop %v657
    %v659 = vmul.f32 %v658, 0.5
    %v660 = vadd.f32 %v659, 0.5
    %v661 = vsel %vm116, %v658, %v660
    %v662 = vmul.f32 %v661, %v492
    %664 = vrot.lane.b32.xlu0 %v661, 64
    %v665 = vpop.permute.xlu0 %664
    %v667 = vmul.f32 %v661, %v665
    %669 = vrot.lane.b32.xlu0 %v667, 32
    %v670 = vpop.permute.xlu0 %669
    %v672 = vadd.f32 %v662, %v670
    %v673 = vtanh.pop %v672
    %675 = vrot.lane.b32.xlu0 %v673, 64
    %v676 = vpop.permute.xlu0 %675
    %v678 = vmul.f32 %v661, %v676
    %v679 = vpack.c.bf16 %v678, %v678
    %v680 = vpack.c.bf16 %v615, %v615
    %682 = vrot.lane.b32.xlu0 %v680, 32
    %v683 = vpop.permute.xlu0 %682
    %v685 = vsel %vm229, %v683, 0
    %687 = vmatprep.subr.bf16.mxu0 0
    %688 = vmatpush1.bf16.msra.mxu0 %v305
    %689 = vmatprep.subr.bf16.mxu0 0
    %690 = vmatpush1.bf16.msra.mxu0 %v306
    %691 = vmatprep.subr.bf16.mxu0 0
    %692 = vmatpush1.bf16.msra.mxu0 0
    %693 = vmatprep.subr.bf16.mxu0 0
    %694 = vmatpush1.bf16.msra.mxu0 0
    %695 = vmatprep.subr.bf16.mxu0 0
    %696 = vmatpush1.bf16.msra.mxu0 0
    %697 = vmatprep.subr.bf16.mxu0 0
    %698 = vmatpush1.bf16.msra.mxu0 0
    %699 = vmatprep.subr.bf16.mxu0 0
    %700 = vmatpush1.bf16.msra.mxu0 0
    %701 = vmatprep.subr.bf16.mxu0 0
    %702 = vmatpush1.bf16.msra.mxu0 0
    %703 = vmatprep.subr.bf16.mxu0 0
    %704 = vmatpush1.bf16.msra.mxu0 0
    %705 = vmatprep.subr.bf16.mxu0 0
    %706 = vmatpush1.bf16.msra.mxu0 0
    %707 = vmatprep.subr.bf16.mxu0 0
    %708 = vmatpush1.bf16.msra.mxu0 0
    %709 = vmatprep.subr.bf16.mxu0 0
    %710 = vmatpush1.bf16.msra.mxu0 0
    %711 = vmatprep.subr.bf16.mxu0 0
    %712 = vmatpush1.bf16.msra.mxu0 0
    %713 = vmatprep.subr.bf16.mxu0 0
    %714 = vmatpush1.bf16.msra.mxu0 0
    %715 = vmatprep.subr.bf16.mxu0 0
    %716 = vmatpush1.bf16.msra.mxu0 0
    %717 = vmatprep.subr.bf16.mxu0 0
    %718 = vmatpush1.bf16.msra.mxu0 0
    %719 = vmatprep.mubr.bf16.mxu0 0
    %720 = vmatmul.mubr.bf16.gmra.mrb[0].mxu0 %v685
    %v721 = vpop.f32.mrb[0].mxu0
    %v722 = vadd.f32 0.0, %v721
    %v723 = vpop.f32.mrb[0].mxu0
    %v724 = vpop.f32.mrb[0].mxu0
    %v725 = vpop.f32.mrb[0].mxu0
    %726 = vdwg.mxu0
    %728 = vrot.lane.b32.xlu0 %v679, 32
    %v729 = vpop.permute.xlu0 %728
    %v731 = vsel %vm229, %v729, 0
    %733 = vmatprep.subr.bf16.mxu0 0
    %734 = vmatpush1.bf16.msra.mxu0 %v360
    %735 = vmatprep.subr.bf16.mxu0 0
    %736 = vmatpush1.bf16.msra.mxu0 %v361
    %737 = vmatprep.subr.bf16.mxu0 0
    %738 = vmatpush1.bf16.msra.mxu0 0
    %739 = vmatprep.subr.bf16.mxu0 0
    %740 = vmatpush1.bf16.msra.mxu0 0
    %741 = vmatprep.subr.bf16.mxu0 0
    %742 = vmatpush1.bf16.msra.mxu0 0
    %743 = vmatprep.subr.bf16.mxu0 0
    %744 = vmatpush1.bf16.msra.mxu0 0
    %745 = vmatprep.subr.bf16.mxu0 0
    %746 = vmatpush1.bf16.msra.mxu0 0
    %747 = vmatprep.subr.bf16.mxu0 0
    %748 = vmatpush1.bf16.msra.mxu0 0
    %749 = vmatprep.subr.bf16.mxu0 0
    %750 = vmatpush1.bf16.msra.mxu0 0
    %751 = vmatprep.subr.bf16.mxu0 0
    %752 = vmatpush1.bf16.msra.mxu0 0
    %753 = vmatprep.subr.bf16.mxu0 0
    %754 = vmatpush1.bf16.msra.mxu0 0
    %755 = vmatprep.subr.bf16.mxu0 0
    %756 = vmatpush1.bf16.msra.mxu0 0
    %757 = vmatprep.subr.bf16.mxu0 0
    %758 = vmatpush1.bf16.msra.mxu0 0
    %759 = vmatprep.subr.bf16.mxu0 0
    %760 = vmatpush1.bf16.msra.mxu0 0
    %761 = vmatprep.subr.bf16.mxu0 0
    %762 = vmatpush1.bf16.msra.mxu0 0
    %763 = vmatprep.subr.bf16.mxu0 0
    %764 = vmatpush1.bf16.msra.mxu0 0
    %765 = vmatprep.mubr.bf16.mxu0 0
    %766 = vmatmul.mubr.bf16.gmra.mrb[0].mxu0 %v731
    %v767 = vpop.f32.mrb[0].mxu0
    %v768 = vadd.f32 %v722, %v767
    %v769 = vpop.f32.mrb[0].mxu0
    %v770 = vpop.f32.mrb[0].mxu0
    %v771 = vpop.f32.mrb[0].mxu0
    %772 = vdwg.mxu0
    %v773 = vadd.f32 %v768, %v411
    %v774 = vmul.f32 %v773, %v117
    %v775 = vtanh.pop %v774
    %v776 = vmul.f32 %v775, 0.5
    %v777 = vadd.f32 %v776, 0.5
    %v778 = vsel %vm116, %v775, %v777
    %v779 = vmul.f32 %v778, %v609
    %781 = vrot.lane.b32.xlu0 %v778, 64
    %v782 = vpop.permute.xlu0 %781
    %v784 = vmul.f32 %v778, %v782
    %786 = vrot.lane.b32.xlu0 %v784, 32
    %v787 = vpop.permute.xlu0 %786
    %v789 = vadd.f32 %v779, %v787
    %v790 = vtanh.pop %v789
    %792 = vrot.lane.b32.xlu0 %v790, 64
    %v793 = vpop.permute.xlu0 %792
    %v795 = vmul.f32 %v778, %v793
    %796 = vmatprep.subr.bf16.mxu0 0
    %797 = vmatpush1.bf16.msra.mxu0 %v225
    %798 = vmatprep.subr.bf16.mxu0 0
    %799 = vmatpush1.bf16.msra.mxu0 %v226
    %800 = vmatprep.subr.bf16.mxu0 0
    %801 = vmatpush1.bf16.msra.mxu0 0
    %802 = vmatprep.subr.bf16.mxu0 0
    %803 = vmatpush1.bf16.msra.mxu0 0
    %804 = vmatprep.subr.bf16.mxu0 0
    %805 = vmatpush1.bf16.msra.mxu0 0
    %806 = vmatprep.subr.bf16.mxu0 0
    %807 = vmatpush1.bf16.msra.mxu0 0
    %808 = vmatprep.subr.bf16.mxu0 0
    %809 = vmatpush1.bf16.msra.mxu0 0
    %810 = vmatprep.subr.bf16.mxu0 0
    %811 = vmatpush1.bf16.msra.mxu0 0
    %812 = vmatprep.subr.bf16.mxu0 0
    %813 = vmatpush1.bf16.msra.mxu0 0
    %814 = vmatprep.subr.bf16.mxu0 0
    %815 = vmatpush1.bf16.msra.mxu0 0
    %816 = vmatprep.subr.bf16.mxu0 0
    %817 = vmatpush1.bf16.msra.mxu0 0
    %818 = vmatprep.subr.bf16.mxu0 0
    %819 = vmatpush1.bf16.msra.mxu0 0
    %820 = vmatprep.subr.bf16.mxu0 0
    %821 = vmatpush1.bf16.msra.mxu0 0
    %822 = vmatprep.subr.bf16.mxu0 0
    %823 = vmatpush1.bf16.msra.mxu0 0
    %824 = vmatprep.subr.bf16.mxu0 0
    %825 = vmatpush1.bf16.msra.mxu0 0
    %826 = vmatprep.subr.bf16.mxu0 0
    %827 = vmatpush1.bf16.msra.mxu0 0
    %828 = vmatprep.mubr.bf16.mxu0 0
    %829 = vmatmul.mubr.bf16.gmra.mrb[0].mxu0 %v731
    %v830 = vpop.f32.mrb[0].mxu0
    %v831 = vadd.f32 0.0, %v830
    %v832 = vpop.f32.mrb[0].mxu0
    %v833 = vpop.f32.mrb[0].mxu0
    %v834 = vpop.f32.mrb[0].mxu0
    %835 = vdwg.mxu0
    %v836 = vadd.f32 %v196, %v831
    %v837 = vmul.f32 %v836, %v117
    %v838 = vtanh.pop %v837
    %v839 = vmul.f32 %v838, 0.5
    %v840 = vadd.f32 %v839, 0.5
    %v841 = vsel %vm116, %v838, %v840
    %v842 = vmul.f32 %v841, %v672
    %844 = vrot.lane.b32.xlu0 %v841, 64
    %v845 = vpop.permute.xlu0 %844
    %v847 = vmul.f32 %v841, %v845
    %849 = vrot.lane.b32.xlu0 %v847, 32
    %v850 = vpop.permute.xlu0 %849
    %v852 = vadd.f32 %v842, %v850
    %v853 = vtanh.pop %v852
    %855 = vrot.lane.b32.xlu0 %v853, 64
    %v856 = vpop.permute.xlu0 %855
    %v858 = vmul.f32 %v841, %v856
    %v859 = vpack.c.bf16 %v858, %v858
    %v860 = vpack.c.bf16 %v795, %v795
    %862 = vrot.lane.b32.xlu0 %v860, 32
    %v863 = vpop.permute.xlu0 %862
    %v865 = vsel %vm229, %v863, 0
    %867 = vmatprep.subr.bf16.mxu0 0
    %868 = vmatpush1.bf16.msra.mxu0 %v305
    %869 = vmatprep.subr.bf16.mxu0 0
    %870 = vmatpush1.bf16.msra.mxu0 %v306
    %871 = vmatprep.subr.bf16.mxu0 0
    %872 = vmatpush1.bf16.msra.mxu0 0
    %873 = vmatprep.subr.bf16.mxu0 0
    %874 = vmatpush1.bf16.msra.mxu0 0
    %875 = vmatprep.subr.bf16.mxu0 0
    %876 = vmatpush1.bf16.msra.mxu0 0
    %877 = vmatprep.subr.bf16.mxu0 0
    %878 = vmatpush1.bf16.msra.mxu0 0
    %879 = vmatprep.subr.bf16.mxu0 0
    %880 = vmatpush1.bf16.msra.mxu0 0
    %881 = vmatprep.subr.bf16.mxu0 0
    %882 = vmatpush1.bf16.msra.mxu0 0
    %883 = vmatprep.subr.bf16.mxu0 0
    %884 = vmatpush1.bf16.msra.mxu0 0
    %885 = vmatprep.subr.bf16.mxu0 0
    %886 = vmatpush1.bf16.msra.mxu0 0
    %887 = vmatprep.subr.bf16.mxu0 0
    %888 = vmatpush1.bf16.msra.mxu0 0
    %889 = vmatprep.subr.bf16.mxu0 0
    %890 = vmatpush1.bf16.msra.mxu0 0
    %891 = vmatprep.subr.bf16.mxu0 0
    %892 = vmatpush1.bf16.msra.mxu0 0
    %893 = vmatprep.subr.bf16.mxu0 0
    %894 = vmatpush1.bf16.msra.mxu0 0
    %895 = vmatprep.subr.bf16.mxu0 0
    %896 = vmatpush1.bf16.msra.mxu0 0
    %897 = vmatprep.subr.bf16.mxu0 0
    %898 = vmatpush1.bf16.msra.mxu0 0
    %899 = vmatprep.mubr.bf16.mxu0 0
    %900 = vmatmul.mubr.bf16.gmra.mrb[0].mxu0 %v865
    %v901 = vpop.f32.mrb[0].mxu0
    %v902 = vadd.f32 0.0, %v901
    %v903 = vpop.f32.mrb[0].mxu0
    %v904 = vpop.f32.mrb[0].mxu0
    %v905 = vpop.f32.mrb[0].mxu0
    %906 = vdwg.mxu0
    %908 = vrot.lane.b32.xlu0 %v859, 32
    %v909 = vpop.permute.xlu0 %908
    %v911 = vsel %vm229, %v909, 0
    %913 = vmatprep.subr.bf16.mxu0 0
    %914 = vmatpush1.bf16.msra.mxu0 %v360
    %915 = vmatprep.subr.bf16.mxu0 0
    %916 = vmatpush1.bf16.msra.mxu0 %v361
    %917 = vmatprep.subr.bf16.mxu0 0
    %918 = vmatpush1.bf16.msra.mxu0 0
    %919 = vmatprep.subr.bf16.mxu0 0
    %920 = vmatpush1.bf16.msra.mxu0 0
    %921 = vmatprep.subr.bf16.mxu0 0
    %922 = vmatpush1.bf16.msra.mxu0 0
    %923 = vmatprep.subr.bf16.mxu0 0
    %924 = vmatpush1.bf16.msra.mxu0 0
    %925 = vmatprep.subr.bf16.mxu0 0
    %926 = vmatpush1.bf16.msra.mxu0 0
    %927 = vmatprep.subr.bf16.mxu0 0
    %928 = vmatpush1.bf16.msra.mxu0 0
    %929 = vmatprep.subr.bf16.mxu0 0
    %930 = vmatpush1.bf16.msra.mxu0 0
    %931 = vmatprep.subr.bf16.mxu0 0
    %932 = vmatpush1.bf16.msra.mxu0 0
    %933 = vmatprep.subr.bf16.mxu0 0
    %934 = vmatpush1.bf16.msra.mxu0 0
    %935 = vmatprep.subr.bf16.mxu0 0
    %936 = vmatpush1.bf16.msra.mxu0 0
    %937 = vmatprep.subr.bf16.mxu0 0
    %938 = vmatpush1.bf16.msra.mxu0 0
    %939 = vmatprep.subr.bf16.mxu0 0
    %940 = vmatpush1.bf16.msra.mxu0 0
    %941 = vmatprep.subr.bf16.mxu0 0
    %942 = vmatpush1.bf16.msra.mxu0 0
    %943 = vmatprep.subr.bf16.mxu0 0
    %944 = vmatpush1.bf16.msra.mxu0 0
    %945 = vmatprep.mubr.bf16.mxu0 0
    %946 = vmatmul.mubr.bf16.gmra.mrb[0].mxu0 %v911
    %v947 = vpop.f32.mrb[0].mxu0
    %v948 = vadd.f32 %v902, %v947
    %v949 = vpop.f32.mrb[0].mxu0
    %v950 = vpop.f32.mrb[0].mxu0
    %v951 = vpop.f32.mrb[0].mxu0
    %952 = vdwg.mxu0
    %v953 = vadd.f32 %v948, %v411
    %v954 = vmul.f32 %v953, %v117
    %v955 = vtanh.pop %v954
    %v956 = vmul.f32 %v955, 0.5
    %v957 = vadd.f32 %v956, 0.5
    %v958 = vsel %vm116, %v955, %v957
    %v959 = vmul.f32 %v958, %v789
    %961 = vrot.lane.b32.xlu0 %v958, 64
    %v962 = vpop.permute.xlu0 %961
    %v964 = vmul.f32 %v958, %v962
    %966 = vrot.lane.b32.xlu0 %v964, 32
    %v967 = vpop.permute.xlu0 %966
    %v969 = vadd.f32 %v959, %v967
    %v970 = vtanh.pop %v969
    %972 = vrot.lane.b32.xlu0 %v970, 64
    %v973 = vpop.permute.xlu0 %972
    %v975 = vmul.f32 %v958, %v973
    %976 = vmatprep.subr.bf16.mxu0 0
    %977 = vmatpush1.bf16.msra.mxu0 %v225
    %978 = vmatprep.subr.bf16.mxu0 0
    %979 = vmatpush1.bf16.msra.mxu0 %v226
    %980 = vmatprep.subr.bf16.mxu0 0
    %981 = vmatpush1.bf16.msra.mxu0 0
    %982 = vmatprep.subr.bf16.mxu0 0
    %983 = vmatpush1.bf16.msra.mxu0 0
    %984 = vmatprep.subr.bf16.mxu0 0
    %985 = vmatpush1.bf16.msra.mxu0 0
    %986 = vmatprep.subr.bf16.mxu0 0
    %987 = vmatpush1.bf16.msra.mxu0 0
    %988 = vmatprep.subr.bf16.mxu0 0
    %989 = vmatpush1.bf16.msra.mxu0 0
    %990 = vmatprep.subr.bf16.mxu0 0
    %991 = vmatpush1.bf16.msra.mxu0 0
    %992 = vmatprep.subr.bf16.mxu0 0
    %993 = vmatpush1.bf16.msra.mxu0 0
    %994 = vmatprep.subr.bf16.mxu0 0
    %995 = vmatpush1.bf16.msra.mxu0 0
    %996 = vmatprep.subr.bf16.mxu0 0
    %997 = vmatpush1.bf16.msra.mxu0 0
    %998 = vmatprep.subr.bf16.mxu0 0
    %999 = vmatpush1.bf16.msra.mxu0 0
    %1000 = vmatprep.subr.bf16.mxu0 0
    %1001 = vmatpush1.bf16.msra.mxu0 0
    %1002 = vmatprep.subr.bf16.mxu0 0
    %1003 = vmatpush1.bf16.msra.mxu0 0
    %1004 = vmatprep.subr.bf16.mxu0 0
    %1005 = vmatpush1.bf16.msra.mxu0 0
    %1006 = vmatprep.subr.bf16.mxu0 0
    %1007 = vmatpush1.bf16.msra.mxu0 0
    %1008 = vmatprep.mubr.bf16.mxu0 0
    %1009 = vmatmul.mubr.bf16.gmra.mrb[0].mxu0 %v911
    %v1010 = vpop.f32.mrb[0].mxu0
    %v1011 = vadd.f32 0.0, %v1010
    %v1012 = vpop.f32.mrb[0].mxu0
    %v1013 = vpop.f32.mrb[0].mxu0
    %v1014 = vpop.f32.mrb[0].mxu0
    %1015 = vdwg.mxu0
    %v1016 = vadd.f32 %v201, %v1011
    %v1017 = vmul.f32 %v1016, %v117
    %v1018 = vtanh.pop %v1017
    %v1019 = vmul.f32 %v1018, 0.5
    %v1020 = vadd.f32 %v1019, 0.5
    %v1021 = vsel %vm116, %v1018, %v1020
    %v1022 = vmul.f32 %v1021, %v852
    %1024 = vrot.lane.b32.xlu0 %v1021, 64
    %v1025 = vpop.permute.xlu0 %1024
    %v1027 = vmul.f32 %v1021, %v1025
    %1029 = vrot.lane.b32.xlu0 %v1027, 32
    %v1030 = vpop.permute.xlu0 %1029
    %v1032 = vadd.f32 %v1022, %v1030
    %v1033 = vtanh.pop %v1032
    %1035 = vrot.lane.b32.xlu0 %v1033, 64
    %v1036 = vpop.permute.xlu0 %1035
    %v1038 = vmul.f32 %v1021, %v1036
    %v1039 = vpack.c.bf16 %v1038, %v1038
    %v1040 = vpack.c.bf16 %v975, %v975
    %1042 = vrot.lane.b32.xlu0 %v1040, 32
    %v1043 = vpop.permute.xlu0 %1042
    %v1045 = vsel %vm229, %v1043, 0
    %1047 = vmatprep.subr.bf16.mxu0 0
    %1048 = vmatpush1.bf16.msra.mxu0 %v305
    %1049 = vmatprep.subr.bf16.mxu0 0
    %1050 = vmatpush1.bf16.msra.mxu0 %v306
    %1051 = vmatprep.subr.bf16.mxu0 0
    %1052 = vmatpush1.bf16.msra.mxu0 0
    %1053 = vmatprep.subr.bf16.mxu0 0
    %1054 = vmatpush1.bf16.msra.mxu0 0
    %1055 = vmatprep.subr.bf16.mxu0 0
    %1056 = vmatpush1.bf16.msra.mxu0 0
    %1057 = vmatprep.subr.bf16.mxu0 0
    %1058 = vmatpush1.bf16.msra.mxu0 0
    %1059 = vmatprep.subr.bf16.mxu0 0
    %1060 = vmatpush1.bf16.msra.mxu0 0
    %1061 = vmatprep.subr.bf16.mxu0 0
    %1062 = vmatpush1.bf16.msra.mxu0 0
    %1063 = vmatprep.subr.bf16.mxu0 0
    %1064 = vmatpush1.bf16.msra.mxu0 0
    %1065 = vmatprep.subr.bf16.mxu0 0
    %1066 = vmatpush1.bf16.msra.mxu0 0
    %1067 = vmatprep.subr.bf16.mxu0 0
    %1068 = vmatpush1.bf16.msra.mxu0 0
    %1069 = vmatprep.subr.bf16.mxu0 0
    %1070 = vmatpush1.bf16.msra.mxu0 0
    %1071 = vmatprep.subr.bf16.mxu0 0
    %1072 = vmatpush1.bf16.msra.mxu0 0
    %1073 = vmatprep.subr.bf16.mxu0 0
    %1074 = vmatpush1.bf16.msra.mxu0 0
    %1075 = vmatprep.subr.bf16.mxu0 0
    %1076 = vmatpush1.bf16.msra.mxu0 0
    %1077 = vmatprep.subr.bf16.mxu0 0
    %1078 = vmatpush1.bf16.msra.mxu0 0
    %1079 = vmatprep.mubr.bf16.mxu0 0
    %1080 = vmatmul.mubr.bf16.gmra.mrb[0].mxu0 %v1045
    %v1081 = vpop.f32.mrb[0].mxu0
    %v1082 = vadd.f32 0.0, %v1081
    %v1083 = vpop.f32.mrb[0].mxu0
    %v1084 = vpop.f32.mrb[0].mxu0
    %v1085 = vpop.f32.mrb[0].mxu0
    %1086 = vdwg.mxu0
    %1088 = vrot.lane.b32.xlu0 %v1039, 32
    %v1089 = vpop.permute.xlu0 %1088
    %v1091 = vsel %vm229, %v1089, 0
    %1093 = vmatprep.subr.bf16.mxu0 0
    %1094 = vmatpush1.bf16.msra.mxu0 %v360
    %1095 = vmatprep.subr.bf16.mxu0 0
    %1096 = vmatpush1.bf16.msra.mxu0 %v361
    %1097 = vmatprep.subr.bf16.mxu0 0
    %1098 = vmatpush1.bf16.msra.mxu0 0
    %1099 = vmatprep.subr.bf16.mxu0 0
    %1100 = vmatpush1.bf16.msra.mxu0 0
    %1101 = vmatprep.subr.bf16.mxu0 0
    %1102 = vmatpush1.bf16.msra.mxu0 0
    %1103 = vmatprep.subr.bf16.mxu0 0
    %1104 = vmatpush1.bf16.msra.mxu0 0
    %1105 = vmatprep.subr.bf16.mxu0 0
    %1106 = vmatpush1.bf16.msra.mxu0 0
    %1107 = vmatprep.subr.bf16.mxu0 0
    %1108 = vmatpush1.bf16.msra.mxu0 0
    %1109 = vmatprep.subr.bf16.mxu0 0
    %1110 = vmatpush1.bf16.msra.mxu0 0
    %1111 = vmatprep.subr.bf16.mxu0 0
    %1112 = vmatpush1.bf16.msra.mxu0 0
    %1113 = vmatprep.subr.bf16.mxu0 0
    %1114 = vmatpush1.bf16.msra.mxu0 0
    %1115 = vmatprep.subr.bf16.mxu0 0
    %1116 = vmatpush1.bf16.msra.mxu0 0
    %1117 = vmatprep.subr.bf16.mxu0 0
    %1118 = vmatpush1.bf16.msra.mxu0 0
    %1119 = vmatprep.subr.bf16.mxu0 0
    %1120 = vmatpush1.bf16.msra.mxu0 0
    %1121 = vmatprep.subr.bf16.mxu0 0
    %1122 = vmatpush1.bf16.msra.mxu0 0
    %1123 = vmatprep.subr.bf16.mxu0 0
    %1124 = vmatpush1.bf16.msra.mxu0 0
    %1125 = vmatprep.mubr.bf16.mxu0 0
    %1126 = vmatmul.mubr.bf16.gmra.mrb[0].mxu0 %v1091
    %v1127 = vpop.f32.mrb[0].mxu0
    %v1128 = vadd.f32 %v1082, %v1127
    %v1129 = vpop.f32.mrb[0].mxu0
    %v1130 = vpop.f32.mrb[0].mxu0
    %v1131 = vpop.f32.mrb[0].mxu0
    %1132 = vdwg.mxu0
    %v1133 = vadd.f32 %v1128, %v411
    %v1134 = vmul.f32 %v1133, %v117
    %v1135 = vtanh.pop %v1134
    %v1136 = vmul.f32 %v1135, 0.5
    %v1137 = vadd.f32 %v1136, 0.5
    %v1138 = vsel %vm116, %v1135, %v1137
    %v1139 = vmul.f32 %v1138, %v969
    %1141 = vrot.lane.b32.xlu0 %v1138, 64
    %v1142 = vpop.permute.xlu0 %1141
    %v1144 = vmul.f32 %v1138, %v1142
    %1146 = vrot.lane.b32.xlu0 %v1144, 32
    %v1147 = vpop.permute.xlu0 %1146
    %v1149 = vadd.f32 %v1139, %v1147
    %v1150 = vtanh.pop %v1149
    %1152 = vrot.lane.b32.xlu0 %v1150, 64
    %v1153 = vpop.permute.xlu0 %1152
    %v1155 = vmul.f32 %v1138, %v1153
    %1156 = vmatprep.subr.bf16.mxu0 0
    %1157 = vmatpush1.bf16.msra.mxu0 %v225
    %1158 = vmatprep.subr.bf16.mxu0 0
    %1159 = vmatpush1.bf16.msra.mxu0 %v226
    %1160 = vmatprep.subr.bf16.mxu0 0
    %1161 = vmatpush1.bf16.msra.mxu0 0
    %1162 = vmatprep.subr.bf16.mxu0 0
    %1163 = vmatpush1.bf16.msra.mxu0 0
    %1164 = vmatprep.subr.bf16.mxu0 0
    %1165 = vmatpush1.bf16.msra.mxu0 0
    %1166 = vmatprep.subr.bf16.mxu0 0
    %1167 = vmatpush1.bf16.msra.mxu0 0
    %1168 = vmatprep.subr.bf16.mxu0 0
    %1169 = vmatpush1.bf16.msra.mxu0 0
    %1170 = vmatprep.subr.bf16.mxu0 0
    %1171 = vmatpush1.bf16.msra.mxu0 0
    %1172 = vmatprep.subr.bf16.mxu0 0
    %1173 = vmatpush1.bf16.msra.mxu0 0
    %1174 = vmatprep.subr.bf16.mxu0 0
    %1175 = vmatpush1.bf16.msra.mxu0 0
    %1176 = vmatprep.subr.bf16.mxu0 0
    %1177 = vmatpush1.bf16.msra.mxu0 0
    %1178 = vmatprep.subr.bf16.mxu0 0
    %1179 = vmatpush1.bf16.msra.mxu0 0
    %1180 = vmatprep.subr.bf16.mxu0 0
    %1181 = vmatpush1.bf16.msra.mxu0 0
    %1182 = vmatprep.subr.bf16.mxu0 0
    %1183 = vmatpush1.bf16.msra.mxu0 0
    %1184 = vmatprep.subr.bf16.mxu0 0
    %1185 = vmatpush1.bf16.msra.mxu0 0
    %1186 = vmatprep.subr.bf16.mxu0 0
    %1187 = vmatpush1.bf16.msra.mxu0 0
    %1188 = vmatprep.mubr.bf16.mxu0 0
    %1189 = vmatmul.mubr.bf16.gmra.mrb[0].mxu0 %v1091
    %v1190 = vpop.f32.mrb[0].mxu0
    %v1191 = vadd.f32 0.0, %v1190
    %v1192 = vpop.f32.mrb[0].mxu0
    %v1193 = vpop.f32.mrb[0].mxu0
    %v1194 = vpop.f32.mrb[0].mxu0
    %1195 = vdwg.mxu0
    %v1196 = vadd.f32 %v206, %v1191
    %v1197 = vmul.f32 %v1196, %v117
    %v1198 = vtanh.pop %v1197
    %v1199 = vmul.f32 %v1198, 0.5
    %v1200 = vadd.f32 %v1199, 0.5
    %v1201 = vsel %vm116, %v1198, %v1200
    %v1202 = vmul.f32 %v1201, %v1032
    %1204 = vrot.lane.b32.xlu0 %v1201, 64
    %v1205 = vpop.permute.xlu0 %1204
    %v1207 = vmul.f32 %v1201, %v1205
    %1209 = vrot.lane.b32.xlu0 %v1207, 32
    %v1210 = vpop.permute.xlu0 %1209
    %v1212 = vadd.f32 %v1202, %v1210
    %v1213 = vtanh.pop %v1212
    %1215 = vrot.lane.b32.xlu0 %v1213, 64
    %v1216 = vpop.permute.xlu0 %1215
    %v1218 = vmul.f32 %v1201, %v1216
    %v1219 = vpack.c.bf16 %v1218, %v1218
    %v1220 = vpack.c.bf16 %v1155, %v1155
    %1222 = vrot.lane.b32.xlu0 %v1220, 32
    %v1223 = vpop.permute.xlu0 %1222
    %v1225 = vsel %vm229, %v1223, 0
    %1227 = vmatprep.subr.bf16.mxu0 0
    %1228 = vmatpush1.bf16.msra.mxu0 %v305
    %1229 = vmatprep.subr.bf16.mxu0 0
    %1230 = vmatpush1.bf16.msra.mxu0 %v306
    %1231 = vmatprep.subr.bf16.mxu0 0
    %1232 = vmatpush1.bf16.msra.mxu0 0
    %1233 = vmatprep.subr.bf16.mxu0 0
    %1234 = vmatpush1.bf16.msra.mxu0 0
    %1235 = vmatprep.subr.bf16.mxu0 0
    %1236 = vmatpush1.bf16.msra.mxu0 0
    %1237 = vmatprep.subr.bf16.mxu0 0
    %1238 = vmatpush1.bf16.msra.mxu0 0
    %1239 = vmatprep.subr.bf16.mxu0 0
    %1240 = vmatpush1.bf16.msra.mxu0 0
    %1241 = vmatprep.subr.bf16.mxu0 0
    %1242 = vmatpush1.bf16.msra.mxu0 0
    %1243 = vmatprep.subr.bf16.mxu0 0
    %1244 = vmatpush1.bf16.msra.mxu0 0
    %1245 = vmatprep.subr.bf16.mxu0 0
    %1246 = vmatpush1.bf16.msra.mxu0 0
    %1247 = vmatprep.subr.bf16.mxu0 0
    %1248 = vmatpush1.bf16.msra.mxu0 0
    %1249 = vmatprep.subr.bf16.mxu0 0
    %1250 = vmatpush1.bf16.msra.mxu0 0
    %1251 = vmatprep.subr.bf16.mxu0 0
    %1252 = vmatpush1.bf16.msra.mxu0 0
    %1253 = vmatprep.subr.bf16.mxu0 0
    %1254 = vmatpush1.bf16.msra.mxu0 0
    %1255 = vmatprep.subr.bf16.mxu0 0
    %1256 = vmatpush1.bf16.msra.mxu0 0
    %1257 = vmatprep.subr.bf16.mxu0 0
    %1258 = vmatpush1.bf16.msra.mxu0 0
    %1259 = vmatprep.mubr.bf16.mxu0 0
    %1260 = vmatmul.mubr.bf16.gmra.mrb[0].mxu0 %v1225
    %v1261 = vpop.f32.mrb[0].mxu0
    %v1262 = vadd.f32 0.0, %v1261
    %v1263 = vpop.f32.mrb[0].mxu0
    %v1264 = vpop.f32.mrb[0].mxu0
    %v1265 = vpop.f32.mrb[0].mxu0
    %1266 = vdwg.mxu0
    %1268 = vrot.lane.b32.xlu0 %v1219, 32
    %v1269 = vpop.permute.xlu0 %1268
    %v1271 = vsel %vm229, %v1269, 0
    %1273 = vmatprep.subr.bf16.mxu0 0
    %1274 = vmatpush1.bf16.msra.mxu0 %v360
    %1275 = vmatprep.subr.bf16.mxu0 0
    %1276 = vmatpush1.bf16.msra.mxu0 %v361
    %1277 = vmatprep.subr.bf16.mxu0 0
    %1278 = vmatpush1.bf16.msra.mxu0 0
    %1279 = vmatprep.subr.bf16.mxu0 0
    %1280 = vmatpush1.bf16.msra.mxu0 0
    %1281 = vmatprep.subr.bf16.mxu0 0
    %1282 = vmatpush1.bf16.msra.mxu0 0
    %1283 = vmatprep.subr.bf16.mxu0 0
    %1284 = vmatpush1.bf16.msra.mxu0 0
    %1285 = vmatprep.subr.bf16.mxu0 0
    %1286 = vmatpush1.bf16.msra.mxu0 0
    %1287 = vmatprep.subr.bf16.mxu0 0
    %1288 = vmatpush1.bf16.msra.mxu0 0
    %1289 = vmatprep.subr.bf16.mxu0 0
    %1290 = vmatpush1.bf16.msra.mxu0 0
    %1291 = vmatprep.subr.bf16.mxu0 0
    %1292 = vmatpush1.bf16.msra.mxu0 0
    %1293 = vmatprep.subr.bf16.mxu0 0
    %1294 = vmatpush1.bf16.msra.mxu0 0
    %1295 = vmatprep.subr.bf16.mxu0 0
    %1296 = vmatpush1.bf16.msra.mxu0 0
    %1297 = vmatprep.subr.bf16.mxu0 0
    %1298 = vmatpush1.bf16.msra.mxu0 0
    %1299 = vmatprep.subr.bf16.mxu0 0
    %1300 = vmatpush1.bf16.msra.mxu0 0
    %1301 = vmatprep.subr.bf16.mxu0 0
    %1302 = vmatpush1.bf16.msra.mxu0 0
    %1303 = vmatprep.subr.bf16.mxu0 0
    %1304 = vmatpush1.bf16.msra.mxu0 0
    %1305 = vmatprep.mubr.bf16.mxu0 0
    %1306 = vmatmul.mubr.bf16.gmra.mrb[0].mxu0 %v1271
    %v1307 = vpop.f32.mrb[0].mxu0
    %v1308 = vadd.f32 %v1262, %v1307
    %v1309 = vpop.f32.mrb[0].mxu0
    %v1310 = vpop.f32.mrb[0].mxu0
    %v1311 = vpop.f32.mrb[0].mxu0
    %1312 = vdwg.mxu0
    %v1313 = vadd.f32 %v1308, %v411
    %v1314 = vmul.f32 %v1313, %v117
    %v1315 = vtanh.pop %v1314
    %v1316 = vmul.f32 %v1315, 0.5
    %v1317 = vadd.f32 %v1316, 0.5
    %v1318 = vsel %vm116, %v1315, %v1317
    %v1319 = vmul.f32 %v1318, %v1149
    %1321 = vrot.lane.b32.xlu0 %v1318, 64
    %v1322 = vpop.permute.xlu0 %1321
    %v1324 = vmul.f32 %v1318, %v1322
    %1326 = vrot.lane.b32.xlu0 %v1324, 32
    %v1327 = vpop.permute.xlu0 %1326
    %v1329 = vadd.f32 %v1319, %v1327
    %v1330 = vtanh.pop %v1329
    %1332 = vrot.lane.b32.xlu0 %v1330, 64
    %v1333 = vpop.permute.xlu0 %1332
    %v1335 = vmul.f32 %v1318, %v1333
    %1336 = vmatprep.subr.bf16.mxu0 0
    %1337 = vmatpush1.bf16.msra.mxu0 %v225
    %1338 = vmatprep.subr.bf16.mxu0 0
    %1339 = vmatpush1.bf16.msra.mxu0 %v226
    %1340 = vmatprep.subr.bf16.mxu0 0
    %1341 = vmatpush1.bf16.msra.mxu0 0
    %1342 = vmatprep.subr.bf16.mxu0 0
    %1343 = vmatpush1.bf16.msra.mxu0 0
    %1344 = vmatprep.subr.bf16.mxu0 0
    %1345 = vmatpush1.bf16.msra.mxu0 0
    %1346 = vmatprep.subr.bf16.mxu0 0
    %1347 = vmatpush1.bf16.msra.mxu0 0
    %1348 = vmatprep.subr.bf16.mxu0 0
    %1349 = vmatpush1.bf16.msra.mxu0 0
    %1350 = vmatprep.subr.bf16.mxu0 0
    %1351 = vmatpush1.bf16.msra.mxu0 0
    %1352 = vmatprep.subr.bf16.mxu0 0
    %1353 = vmatpush1.bf16.msra.mxu0 0
    %1354 = vmatprep.subr.bf16.mxu0 0
    %1355 = vmatpush1.bf16.msra.mxu0 0
    %1356 = vmatprep.subr.bf16.mxu0 0
    %1357 = vmatpush1.bf16.msra.mxu0 0
    %1358 = vmatprep.subr.bf16.mxu0 0
    %1359 = vmatpush1.bf16.msra.mxu0 0
    %1360 = vmatprep.subr.bf16.mxu0 0
    %1361 = vmatpush1.bf16.msra.mxu0 0
    %1362 = vmatprep.subr.bf16.mxu0 0
    %1363 = vmatpush1.bf16.msra.mxu0 0
    %1364 = vmatprep.subr.bf16.mxu0 0
    %1365 = vmatpush1.bf16.msra.mxu0 0
    %1366 = vmatprep.subr.bf16.mxu0 0
    %1367 = vmatpush1.bf16.msra.mxu0 0
    %1368 = vmatprep.mubr.bf16.mxu0 0
    %1369 = vmatmul.mubr.bf16.gmra.mrb[0].mxu0 %v1271
    %v1370 = vpop.f32.mrb[0].mxu0
    %v1371 = vadd.f32 0.0, %v1370
    %v1372 = vpop.f32.mrb[0].mxu0
    %v1373 = vpop.f32.mrb[0].mxu0
    %v1374 = vpop.f32.mrb[0].mxu0
    %1375 = vdwg.mxu0
    %v1376 = vadd.f32 %v211, %v1371
    %v1377 = vmul.f32 %v1376, %v117
    %v1378 = vtanh.pop %v1377
    %v1379 = vmul.f32 %v1378, 0.5
    %v1380 = vadd.f32 %v1379, 0.5
    %v1381 = vsel %vm116, %v1378, %v1380
    %v1382 = vmul.f32 %v1381, %v1212
    %1384 = vrot.lane.b32.xlu0 %v1381, 64
    %v1385 = vpop.permute.xlu0 %1384
    %v1387 = vmul.f32 %v1381, %v1385
    %1389 = vrot.lane.b32.xlu0 %v1387, 32
    %v1390 = vpop.permute.xlu0 %1389
    %v1392 = vadd.f32 %v1382, %v1390
    %v1393 = vtanh.pop %v1392
    %1395 = vrot.lane.b32.xlu0 %v1393, 64
    %v1396 = vpop.permute.xlu0 %1395
    %v1398 = vmul.f32 %v1381, %v1396
    %v1399 = vpack.c.bf16 %v1398, %v1398
    %v1400 = vpack.c.bf16 %v1335, %v1335
    %1402 = vrot.lane.b32.xlu0 %v1400, 32
    %v1403 = vpop.permute.xlu0 %1402
    %v1405 = vsel %vm229, %v1403, 0
    %1407 = vmatprep.subr.bf16.mxu0 0
    %1408 = vmatpush1.bf16.msra.mxu0 %v305
    %1409 = vmatprep.subr.bf16.mxu0 0
    %1410 = vmatpush1.bf16.msra.mxu0 %v306
    %1411 = vmatprep.subr.bf16.mxu0 0
    %1412 = vmatpush1.bf16.msra.mxu0 0
    %1413 = vmatprep.subr.bf16.mxu0 0
    %1414 = vmatpush1.bf16.msra.mxu0 0
    %1415 = vmatprep.subr.bf16.mxu0 0
    %1416 = vmatpush1.bf16.msra.mxu0 0
    %1417 = vmatprep.subr.bf16.mxu0 0
    %1418 = vmatpush1.bf16.msra.mxu0 0
    %1419 = vmatprep.subr.bf16.mxu0 0
    %1420 = vmatpush1.bf16.msra.mxu0 0
    %1421 = vmatprep.subr.bf16.mxu0 0
    %1422 = vmatpush1.bf16.msra.mxu0 0
    %1423 = vmatprep.subr.bf16.mxu0 0
    %1424 = vmatpush1.bf16.msra.mxu0 0
    %1425 = vmatprep.subr.bf16.mxu0 0
    %1426 = vmatpush1.bf16.msra.mxu0 0
    %1427 = vmatprep.subr.bf16.mxu0 0
    %1428 = vmatpush1.bf16.msra.mxu0 0
    %1429 = vmatprep.subr.bf16.mxu0 0
    %1430 = vmatpush1.bf16.msra.mxu0 0
    %1431 = vmatprep.subr.bf16.mxu0 0
    %1432 = vmatpush1.bf16.msra.mxu0 0
    %1433 = vmatprep.subr.bf16.mxu0 0
    %1434 = vmatpush1.bf16.msra.mxu0 0
    %1435 = vmatprep.subr.bf16.mxu0 0
    %1436 = vmatpush1.bf16.msra.mxu0 0
    %1437 = vmatprep.subr.bf16.mxu0 0
    %1438 = vmatpush1.bf16.msra.mxu0 0
    %1439 = vmatprep.mubr.bf16.mxu0 0
    %1440 = vmatmul.mubr.bf16.gmra.mrb[0].mxu0 %v1405
    %v1441 = vpop.f32.mrb[0].mxu0
    %v1442 = vadd.f32 0.0, %v1441
    %v1443 = vpop.f32.mrb[0].mxu0
    %v1444 = vpop.f32.mrb[0].mxu0
    %v1445 = vpop.f32.mrb[0].mxu0
    %1446 = vdwg.mxu0
    %1448 = vrot.lane.b32.xlu0 %v1399, 32
    %v1449 = vpop.permute.xlu0 %1448
    %v1451 = vsel %vm229, %v1449, 0
    %1453 = vmatprep.subr.bf16.mxu0 0
    %1454 = vmatpush1.bf16.msra.mxu0 %v360
    %1455 = vmatprep.subr.bf16.mxu0 0
    %1456 = vmatpush1.bf16.msra.mxu0 %v361
    %1457 = vmatprep.subr.bf16.mxu0 0
    %1458 = vmatpush1.bf16.msra.mxu0 0
    %1459 = vmatprep.subr.bf16.mxu0 0
    %1460 = vmatpush1.bf16.msra.mxu0 0
    %1461 = vmatprep.subr.bf16.mxu0 0
    %1462 = vmatpush1.bf16.msra.mxu0 0
    %1463 = vmatprep.subr.bf16.mxu0 0
    %1464 = vmatpush1.bf16.msra.mxu0 0
    %1465 = vmatprep.subr.bf16.mxu0 0
    %1466 = vmatpush1.bf16.msra.mxu0 0
    %1467 = vmatprep.subr.bf16.mxu0 0
    %1468 = vmatpush1.bf16.msra.mxu0 0
    %1469 = vmatprep.subr.bf16.mxu0 0
    %1470 = vmatpush1.bf16.msra.mxu0 0
    %1471 = vmatprep.subr.bf16.mxu0 0
    %1472 = vmatpush1.bf16.msra.mxu0 0
    %1473 = vmatprep.subr.bf16.mxu0 0
    %1474 = vmatpush1.bf16.msra.mxu0 0
    %1475 = vmatprep.subr.bf16.mxu0 0
    %1476 = vmatpush1.bf16.msra.mxu0 0
    %1477 = vmatprep.subr.bf16.mxu0 0
    %1478 = vmatpush1.bf16.msra.mxu0 0
    %1479 = vmatprep.subr.bf16.mxu0 0
    %1480 = vmatpush1.bf16.msra.mxu0 0
    %1481 = vmatprep.subr.bf16.mxu0 0
    %1482 = vmatpush1.bf16.msra.mxu0 0
    %1483 = vmatprep.subr.bf16.mxu0 0
    %1484 = vmatpush1.bf16.msra.mxu0 0
    %1485 = vmatprep.mubr.bf16.mxu0 0
    %1486 = vmatmul.mubr.bf16.gmra.mrb[0].mxu0 %v1451
    %v1487 = vpop.f32.mrb[0].mxu0
    %v1488 = vadd.f32 %v1442, %v1487
    %v1489 = vpop.f32.mrb[0].mxu0
    %v1490 = vpop.f32.mrb[0].mxu0
    %v1491 = vpop.f32.mrb[0].mxu0
    %1492 = vdwg.mxu0
    %v1493 = vadd.f32 %v1488, %v411
    %v1494 = vmul.f32 %v1493, %v117
    %v1495 = vtanh.pop %v1494
    %v1496 = vmul.f32 %v1495, 0.5
    %v1497 = vadd.f32 %v1496, 0.5
    %v1498 = vsel %vm116, %v1495, %v1497
    %v1499 = vmul.f32 %v1498, %v1329
    %1501 = vrot.lane.b32.xlu0 %v1498, 64
    %v1502 = vpop.permute.xlu0 %1501
    %v1504 = vmul.f32 %v1498, %v1502
    %1506 = vrot.lane.b32.xlu0 %v1504, 32
    %v1507 = vpop.permute.xlu0 %1506
    %v1509 = vadd.f32 %v1499, %v1507
    %v1510 = vtanh.pop %v1509
    %1512 = vrot.lane.b32.xlu0 %v1510, 64
    %v1513 = vpop.permute.xlu0 %1512
    %v1515 = vmul.f32 %v1498, %v1513
    %1516 = vmatprep.subr.bf16.mxu0 0
    %1517 = vmatpush1.bf16.msra.mxu0 %v225
    %1518 = vmatprep.subr.bf16.mxu0 0
    %1519 = vmatpush1.bf16.msra.mxu0 %v226
    %1520 = vmatprep.subr.bf16.mxu0 0
    %1521 = vmatpush1.bf16.msra.mxu0 0
    %1522 = vmatprep.subr.bf16.mxu0 0
    %1523 = vmatpush1.bf16.msra.mxu0 0
    %1524 = vmatprep.subr.bf16.mxu0 0
    %1525 = vmatpush1.bf16.msra.mxu0 0
    %1526 = vmatprep.subr.bf16.mxu0 0
    %1527 = vmatpush1.bf16.msra.mxu0 0
    %1528 = vmatprep.subr.bf16.mxu0 0
    %1529 = vmatpush1.bf16.msra.mxu0 0
    %1530 = vmatprep.subr.bf16.mxu0 0
    %1531 = vmatpush1.bf16.msra.mxu0 0
    %1532 = vmatprep.subr.bf16.mxu0 0
    %1533 = vmatpush1.bf16.msra.mxu0 0
    %1534 = vmatprep.subr.bf16.mxu0 0
    %1535 = vmatpush1.bf16.msra.mxu0 0
    %1536 = vmatprep.subr.bf16.mxu0 0
    %1537 = vmatpush1.bf16.msra.mxu0 0
    %1538 = vmatprep.subr.bf16.mxu0 0
    %1539 = vmatpush1.bf16.msra.mxu0 0
    %1540 = vmatprep.subr.bf16.mxu0 0
    %1541 = vmatpush1.bf16.msra.mxu0 0
    %1542 = vmatprep.subr.bf16.mxu0 0
    %1543 = vmatpush1.bf16.msra.mxu0 0
    %1544 = vmatprep.subr.bf16.mxu0 0
    %1545 = vmatpush1.bf16.msra.mxu0 0
    %1546 = vmatprep.subr.bf16.mxu0 0
    %1547 = vmatpush1.bf16.msra.mxu0 0
    %1548 = vmatprep.mubr.bf16.mxu0 0
    %1549 = vmatmul.mubr.bf16.gmra.mrb[0].mxu0 %v1451
    %v1550 = vpop.f32.mrb[0].mxu0
    %v1551 = vadd.f32 0.0, %v1550
    %v1552 = vpop.f32.mrb[0].mxu0
    %v1553 = vpop.f32.mrb[0].mxu0
    %v1554 = vpop.f32.mrb[0].mxu0
    %1555 = vdwg.mxu0
    %v1556 = vadd.f32 %v216, %v1551
    %v1557 = vmul.f32 %v1556, %v117
    %v1558 = vtanh.pop %v1557
    %v1559 = vmul.f32 %v1558, 0.5
    %v1560 = vadd.f32 %v1559, 0.5
    %v1561 = vsel %vm116, %v1558, %v1560
    %v1562 = vmul.f32 %v1561, %v1392
    %1564 = vrot.lane.b32.xlu0 %v1561, 64
    %v1565 = vpop.permute.xlu0 %1564
    %v1567 = vmul.f32 %v1561, %v1565
    %1569 = vrot.lane.b32.xlu0 %v1567, 32
    %v1570 = vpop.permute.xlu0 %1569
    %v1572 = vadd.f32 %v1562, %v1570
    %v1573 = vtanh.pop %v1572
    %1575 = vrot.lane.b32.xlu0 %v1573, 64
    %v1576 = vpop.permute.xlu0 %1575
    %v1578 = vmul.f32 %v1561, %v1576
    %v1579 = vpack.c.bf16 %v1578, %v1578
    %v1580 = vpack.c.bf16 %v1515, %v1515
    %1582 = vrot.lane.b32.xlu0 %v1580, 32
    %v1583 = vpop.permute.xlu0 %1582
    %v1585 = vsel %vm229, %v1583, 0
    %1587 = vmatprep.subr.bf16.mxu0 0
    %1588 = vmatpush1.bf16.msra.mxu0 %v305
    %1589 = vmatprep.subr.bf16.mxu0 0
    %1590 = vmatpush1.bf16.msra.mxu0 %v306
    %1591 = vmatprep.subr.bf16.mxu0 0
    %1592 = vmatpush1.bf16.msra.mxu0 0
    %1593 = vmatprep.subr.bf16.mxu0 0
    %1594 = vmatpush1.bf16.msra.mxu0 0
    %1595 = vmatprep.subr.bf16.mxu0 0
    %1596 = vmatpush1.bf16.msra.mxu0 0
    %1597 = vmatprep.subr.bf16.mxu0 0
    %1598 = vmatpush1.bf16.msra.mxu0 0
    %1599 = vmatprep.subr.bf16.mxu0 0
    %1600 = vmatpush1.bf16.msra.mxu0 0
    %1601 = vmatprep.subr.bf16.mxu0 0
    %1602 = vmatpush1.bf16.msra.mxu0 0
    %1603 = vmatprep.subr.bf16.mxu0 0
    %1604 = vmatpush1.bf16.msra.mxu0 0
    %1605 = vmatprep.subr.bf16.mxu0 0
    %1606 = vmatpush1.bf16.msra.mxu0 0
    %1607 = vmatprep.subr.bf16.mxu0 0
    %1608 = vmatpush1.bf16.msra.mxu0 0
    %1609 = vmatprep.subr.bf16.mxu0 0
    %1610 = vmatpush1.bf16.msra.mxu0 0
    %1611 = vmatprep.subr.bf16.mxu0 0
    %1612 = vmatpush1.bf16.msra.mxu0 0
    %1613 = vmatprep.subr.bf16.mxu0 0
    %1614 = vmatpush1.bf16.msra.mxu0 0
    %1615 = vmatprep.subr.bf16.mxu0 0
    %1616 = vmatpush1.bf16.msra.mxu0 0
    %1617 = vmatprep.subr.bf16.mxu0 0
    %1618 = vmatpush1.bf16.msra.mxu0 0
    %1619 = vmatprep.mubr.bf16.mxu0 0
    %1620 = vmatmul.mubr.bf16.gmra.mrb[0].mxu0 %v1585
    %v1621 = vpop.f32.mrb[0].mxu0
    %v1622 = vadd.f32 0.0, %v1621
    %v1623 = vpop.f32.mrb[0].mxu0
    %v1624 = vpop.f32.mrb[0].mxu0
    %v1625 = vpop.f32.mrb[0].mxu0
    %1626 = vdwg.mxu0
    %1628 = vrot.lane.b32.xlu0 %v1579, 32
    %v1629 = vpop.permute.xlu0 %1628
    %v1631 = vsel %vm229, %v1629, 0
    %1633 = vmatprep.subr.bf16.mxu0 0
    %1634 = vmatpush1.bf16.msra.mxu0 %v360
    %1635 = vmatprep.subr.bf16.mxu0 0
    %1636 = vmatpush1.bf16.msra.mxu0 %v361
    %1637 = vmatprep.subr.bf16.mxu0 0
    %1638 = vmatpush1.bf16.msra.mxu0 0
    %1639 = vmatprep.subr.bf16.mxu0 0
    %1640 = vmatpush1.bf16.msra.mxu0 0
    %1641 = vmatprep.subr.bf16.mxu0 0
    %1642 = vmatpush1.bf16.msra.mxu0 0
    %1643 = vmatprep.subr.bf16.mxu0 0
    %1644 = vmatpush1.bf16.msra.mxu0 0
    %1645 = vmatprep.subr.bf16.mxu0 0
    %1646 = vmatpush1.bf16.msra.mxu0 0
    %1647 = vmatprep.subr.bf16.mxu0 0
    %1648 = vmatpush1.bf16.msra.mxu0 0
    %1649 = vmatprep.subr.bf16.mxu0 0
    %1650 = vmatpush1.bf16.msra.mxu0 0
    %1651 = vmatprep.subr.bf16.mxu0 0
    %1652 = vmatpush1.bf16.msra.mxu0 0
    %1653 = vmatprep.subr.bf16.mxu0 0
    %1654 = vmatpush1.bf16.msra.mxu0 0
    %1655 = vmatprep.subr.bf16.mxu0 0
    %1656 = vmatpush1.bf16.msra.mxu0 0
    %1657 = vmatprep.subr.bf16.mxu0 0
    %1658 = vmatpush1.bf16.msra.mxu0 0
    %1659 = vmatprep.subr.bf16.mxu0 0
    %1660 = vmatpush1.bf16.msra.mxu0 0
    %1661 = vmatprep.subr.bf16.mxu0 0
    %1662 = vmatpush1.bf16.msra.mxu0 0
    %1663 = vmatprep.subr.bf16.mxu0 0
    %1664 = vmatpush1.bf16.msra.mxu0 0
    %1665 = vmatprep.mubr.bf16.mxu0 0
    %1666 = vmatmul.mubr.bf16.gmra.mrb[0].mxu0 %v1631
    %v1667 = vpop.f32.mrb[0].mxu0
    %v1668 = vadd.f32 %v1622, %v1667
    %v1669 = vpop.f32.mrb[0].mxu0
    %v1670 = vpop.f32.mrb[0].mxu0
    %v1671 = vpop.f32.mrb[0].mxu0
    %1672 = vdwg.mxu0
    %v1673 = vadd.f32 %v1668, %v411
    %v1674 = vmul.f32 %v1673, %v117
    %v1675 = vtanh.pop %v1674
    %v1676 = vmul.f32 %v1675, 0.5
    %v1677 = vadd.f32 %v1676, 0.5
    %v1678 = vsel %vm116, %v1675, %v1677
    %v1679 = vmul.f32 %v1678, %v1509
    %1681 = vrot.lane.b32.xlu0 %v1678, 64
    %v1682 = vpop.permute.xlu0 %1681
    %v1684 = vmul.f32 %v1678, %v1682
    %1686 = vrot.lane.b32.xlu0 %v1684, 32
    %v1687 = vpop.permute.xlu0 %1686
    %v1689 = vadd.f32 %v1679, %v1687
    %v1690 = vtanh.pop %v1689
    %1692 = vrot.lane.b32.xlu0 %v1690, 64
    %v1693 = vpop.permute.xlu0 %1692
    %v1695 = vmul.f32 %v1678, %v1693
    %v1696 = vpack.c.bf16 %v1695, %v1695
    %v1697 = vld [vmem:[%s7] sm:$0xf]
    %v1698 = vld [vmem:[%s7 + $0x4] sm:$0xf]
    %v1699 = vld [vmem:[%s7 + $0x8] sm:$0xf]
    %v1700 = vld [vmem:[%s7 + $0xc] sm:$0xf]
    %v1701 = vld [vmem:[#allocation10] sm:$0x1]
    %v1703 = vlaneseq
    %v1704 = vshrl.u32 %v1703, 7
    %v1705 = vsub.s32 0, %v1704
    %v1706 = vrot.slane %v1701, %v1705
    %1709 = vrot.lane.b32.xlu0 %v1696, 32
    %v1710 = vpop.permute.xlu0 %1709
    %v1715 = vunpack.c.l.b16 %v1697
    %v1716 = vunpack.c.l.b16 %v1698
    %v1717 = vunpack.c.l.b16 %v1699
    %v1718 = vunpack.c.l.b16 %v1700
    %v1719 = vpack.c.b16 %v1716, %v1715
    %v1720 = vpack.c.b16 %v1718, %v1717
    %v1724 = vsel %vm229, %v1710, 0
    %1726 = vmatprep.subr.bf16.mxu0 0
    %1727 = vmatpush1.bf16.msra.mxu0 %v1719
    %1728 = vmatprep.subr.bf16.mxu0 0
    %1729 = vmatpush1.bf16.msra.mxu0 %v1720
    %1730 = vmatprep.subr.bf16.mxu0 0
    %1731 = vmatpush1.bf16.msra.mxu0 0
    %1732 = vmatprep.subr.bf16.mxu0 0
    %1733 = vmatpush1.bf16.msra.mxu0 0
    %1734 = vmatprep.subr.bf16.mxu0 0
    %1735 = vmatpush1.bf16.msra.mxu0 0
    %1736 = vmatprep.subr.bf16.mxu0 0
    %1737 = vmatpush1.bf16.msra.mxu0 0
    %1738 = vmatprep.subr.bf16.mxu0 0
    %1739 = vmatpush1.bf16.msra.mxu0 0
    %1740 = vmatprep.subr.bf16.mxu0 0
    %1741 = vmatpush1.bf16.msra.mxu0 0
    %1742 = vmatprep.subr.bf16.mxu0 0
    %1743 = vmatpush1.bf16.msra.mxu0 0
    %1744 = vmatprep.subr.bf16.mxu0 0
    %1745 = vmatpush1.bf16.msra.mxu0 0
    %1746 = vmatprep.subr.bf16.mxu0 0
    %1747 = vmatpush1.bf16.msra.mxu0 0
    %1748 = vmatprep.subr.bf16.mxu0 0
    %1749 = vmatpush1.bf16.msra.mxu0 0
    %1750 = vmatprep.subr.bf16.mxu0 0
    %1751 = vmatpush1.bf16.msra.mxu0 0
    %1752 = vmatprep.subr.bf16.mxu0 0
    %1753 = vmatpush1.bf16.msra.mxu0 0
    %1754 = vmatprep.subr.bf16.mxu0 0
    %1755 = vmatpush1.bf16.msra.mxu0 0
    %1756 = vmatprep.subr.bf16.mxu0 0
    %1757 = vmatpush1.bf16.msra.mxu0 0
    %1758 = vmatprep.mubr.bf16.mxu0 0
    %1759 = vmatmul.mubr.bf16.gmra.mrb[0].mxu0 %v1724
    %v1760 = vpop.f32.mrb[0].mxu0
    %v1761 = vadd.f32 %v1706, %v1760
    %v1762 = vpop.f32.mrb[0].mxu0
    %v1763 = vpop.f32.mrb[0].mxu0
    %v1764 = vpop.f32.mrb[0].mxu0
    %1765 = vdwg.mxu0
    %vm1766 = vcmask 25600
    %1767 = vst.msk [vmem:[#allocation11] sm:$0x3] %vm1766, %v1761
    // Predicated region
    $region58: #{lstm_model_forward.1} parent=1 // pred_check
      _
    $region59: #{lstm_model_forward.1} parent=1 // pred_check_branch
      %1769 = sbr.rel (0) target = $region61
    $region60: #{lstm_model_forward.1} parent=1 // pred_region
      %s1771 = ssub.s32 32, 32
      %1772 = vsyncadd [#allocation4], %s1771
      %s1774 = sshll.u32 [#allocation11], 4
      %s1775 = int_to_ptr.vmem [resolvable:$true] %s1774
      %1777 = dma.vmem_to_hbm [thread:$0]  %s1775, 32, %s9, [#allocation4]
    $region61: #{lstm_model_forward.1} parent=1 // pred_fallthru
      _
    // Predicated region
    $region62: #{lstm_model_forward.1} parent=1 // pred_check
      _
    $region63: #{lstm_model_forward.1} parent=1 // pred_check_branch
      %1779 = sbr.rel (0) target = $region65
    $region64: #{lstm_model_forward.1} parent=1 // pred_region
      %1780 = dma.done [#allocation4], 32
    $region65: #{lstm_model_forward.1} parent=1 // pred_fallthru
      _
    %1781 = vsyncpa [#allocation3], 1
    %1782 = vsyncpa [#allocation6], 1
    %1783 = vsyncpa [#allocation9], 1
    %1784 = vsyncpa [#allocation4], 1

</llo_original>
